<compile_context>
chip_gen: v5e
topology: v5e:2x2
jax: 0.10.0
libtpu: 0.0.40
codegen_flags: <defaults>
</compile_context>

<pallas_src>
import functools
import math

import jax
import jax.numpy as jnp
from jax import lax
from jax.experimental import pallas as pl
from jax.experimental.pallas import tpu as pltpu

LN_EPS = 1e-12  # BERT LayerNorm eps


def _layer_norm(x, gamma, beta):
    mu = jnp.mean(x, axis=-1, keepdims=True)
    var = jnp.mean((x - mu) ** 2, axis=-1, keepdims=True)
    return (x - mu) * jax.lax.rsqrt(var + LN_EPS) * gamma + beta


def bert_stack_kernel(x_ref, mask_ref,
                      wq_ref, bq_ref, wk_ref, bk_ref, wv_ref, bv_ref,
                      wo_ref, bo_ref, g1_ref, be1_ref,
                      w1_ref, b1_ref, w2_ref, b2_ref, g2_ref, be2_ref,
                      o_ref, x_scr, ctx_scr, *, num_heads):
    """One grid step = one BERT encoder layer for one batch element.

    grid = (B, NL): batch axis parallel, layer axis arbitrary.  The hidden state x_scr is
    resident in VMEM across the layer axis; the masked-mean-pooling head runs at the last layer.
    """
    l = pl.program_id(1)

    @pl.when(l == 0)
    def _():
        # Load the embedded sequence from HBM exactly once per batch element.
        x_scr[...] = x_ref[0]

    x = x_scr[...]              # (S, H) f32, resident across layers
    S, H = x.shape
    hd = H // num_heads
    mask_add = mask_ref[0]      # (1, S) additive mask: 0 keep, -1e9 masked (f32)

    # ---- self-attention -------------------------------------------------------------
    x_bf = x.astype(jnp.bfloat16)
    q = jnp.dot(x_bf, wq_ref[0], preferred_element_type=jnp.float32) + bq_ref[0]
    k = jnp.dot(x_bf, wk_ref[0], preferred_element_type=jnp.float32) + bk_ref[0]
    v = jnp.dot(x_bf, wv_ref[0], preferred_element_type=jnp.float32) + bv_ref[0]
    q_bf = q.astype(jnp.bfloat16)
    k_bf = k.astype(jnp.bfloat16)
    v_bf = v.astype(jnp.bfloat16)

    inv_sqrt_hd = 1.0 / math.sqrt(hd)
    # Hoisted once: JAX does not CSE broadcast_in_dim inside the unrolled head loop.
    mask_ss = jnp.broadcast_to(mask_add, (S, S))
    # Contract last dims of q and k directly on the MXU (no kh.T / XLU transpose per head).
    dn = (((1,), (1,)), ((), ()))

    for h in range(num_heads):                 # static unrolled head loop (no 3-D reshapes)
        sl = slice(h * hd, (h + 1) * hd)
        qh, kh, vh = q_bf[:, sl], k_bf[:, sl], v_bf[:, sl]        # (S, hd) bf16
        scores = lax.dot_general(qh, kh, dimension_numbers=dn,
                                 preferred_element_type=jnp.float32) * inv_sqrt_hd  # (S, S)
        scores = scores + mask_ss
        scores = scores - jnp.max(scores, axis=-1, keepdims=True)
        probs = jnp.exp(scores)
        inv_den = pl.reciprocal(jnp.sum(probs, axis=-1, keepdims=True), approx=True)
        probs_bf = (probs * inv_den).astype(jnp.bfloat16)
        # Each head's context goes straight into full-width VMEM scratch (no concatenate).
        ctx_scr[:, sl] = jnp.dot(probs_bf, vh, preferred_element_type=jnp.float32)

    ctx_bf = ctx_scr[...].astype(jnp.bfloat16)                    # (S, H)
    attn_out = jnp.dot(ctx_bf, wo_ref[0], preferred_element_type=jnp.float32) + bo_ref[0]
    x1 = _layer_norm(x + attn_out, g1_ref[0], be1_ref[0])         # f32

    # ---- feed-forward ---------------------------------------------------------------
    hdn = jnp.dot(x1.astype(jnp.bfloat16), w1_ref[0],
                  preferred_element_type=jnp.float32) + b1_ref[0]
    # TODO(synk): HF BERT uses erf GELU; tanh-approx is used here (numerically very close).
    hdn = jax.nn.gelu(hdn)
    ff = jnp.dot(hdn.astype(jnp.bfloat16), w2_ref[0],
                 preferred_element_type=jnp.float32) + b2_ref[0]
    x2 = _layer_norm(x1 + ff, g2_ref[0], be2_ref[0])              # (S, H) f32

    x_scr[...] = x2             # stays in VMEM for the next layer (no HBM round trip)

    @pl.when(l == pl.num_programs(1) - 1)
    def _():
        # Fused SBERT masked-mean-pooling head: sum over valid tokens / clamp(count, 1e-9).
        keep = (mask_add >= -0.5).astype(jnp.float32)             # (1, S): 1 = valid token
        summed = jnp.dot(keep, x2, preferred_element_type=jnp.float32)   # (1, H)
        denom = jnp.maximum(jnp.sum(keep, axis=-1, keepdims=True), 1e-9)
        o_ref[0] = summed / denom


def bert_encoder_pooled(x, mask_add, sp, num_heads):
    """Run the full stacked encoder + pooling head in one pallas_call.

    x        : (B, S, H) f32 embedded inputs
    mask_add : (B, 1, S) f32 additive attention mask
    sp       : dict of stacked per-layer params, each with leading (NL, ...) axis
    returns  : (B, H) sentence embeddings
    """
    B, S, H = x.shape
    NL = sp["wq"].shape[0]
    F_ = sp["w1"].shape[2]

    def wspec(shape):
        # Per-layer weight slice: select layer l along the leading stacked axis.
        return pl.BlockSpec(shape, lambda b, l, _s=shape: (l,) + (0,) * (len(_s) - 1))

    in_specs = [
        pl.BlockSpec((1, S, H), lambda b, l: (b, 0, 0)),   # x (resident across layers)
        pl.BlockSpec((1, 1, S), lambda b, l: (b, 0, 0)),   # additive mask (resident)
        wspec((1, H, H)), wspec((1, 1, H)),                # Wq (bf16), bq
        wspec((1, H, H)), wspec((1, 1, H)),                # Wk, bk
        wspec((1, H, H)), wspec((1, 1, H)),                # Wv, bv
        wspec((1, H, H)), wspec((1, 1, H)),                # Wo, bo
        wspec((1, 1, H)), wspec((1, 1, H)),                # LN1 gamma, beta
        wspec((1, H, F_)), wspec((1, 1, F_)),              # W1, b1
        wspec((1, F_, H)), wspec((1, 1, H)),               # W2, b2
        wspec((1, 1, H)), wspec((1, 1, H)),                # LN2 gamma, beta
    ]

    out_shape = jax.ShapeDtypeStruct((B, 1, H), jnp.float32)
    out_specs = pl.BlockSpec((1, 1, H), lambda b, l: (b, 0, 0))    # written at last layer only

    # Advisory cost estimate so XLA schedules around the fused encoder sensibly.
    flops = B * NL * (8 * S * H * H + 4 * S * S * H + 4 * S * H * F_)
    transcendentals = B * NL * (num_heads * S * S + S * F_ + 2 * S)
    weight_bytes = NL * ((4 * H * H + 2 * H * F_) * 2 + (7 * H + F_) * 4)
    io_bytes = B * (S * H * 4 + H * 4 + S * 4)
    cost = pl.CostEstimate(flops=flops, transcendentals=transcendentals,
                           bytes_accessed=weight_bytes + io_bytes)

    pooled = pl.pallas_call(
        functools.partial(bert_stack_kernel, num_heads=num_heads),
        out_shape=out_shape,
        grid=(B, NL),
        in_specs=in_specs,
        out_specs=out_specs,
        scratch_shapes=[pltpu.VMEM((S, H), jnp.float32),   # resident hidden state
                        pltpu.VMEM((S, H), jnp.float32)],  # per-head context scratch
        compiler_params=pltpu.CompilerParams(
            dimension_semantics=("parallel", "arbitrary"),
            vmem_limit_bytes=64 * 1024 * 1024,   # above the 32 MiB scoped default
        ),
        cost_estimate=cost,
    )(x, mask_add,
      sp["wq"], sp["bq"], sp["wk"], sp["bk"], sp["wv"], sp["bv"],
      sp["wo"], sp["bo"], sp["ln1_g"], sp["ln1_b"],
      sp["w1"], sp["b1"], sp["w2"], sp["b2"], sp["ln2_g"], sp["ln2_b"])
    return pooled[:, 0, :]


def bert_embed(input_ids, p):
    # Embedding lookup (gather) + embedding LayerNorm kept in plain JAX glue.
    B, S = input_ids.shape
    tok = p["tok_emb"][input_ids]                       # (B, S, H)
    pos = p["pos_emb"][:S][None]                        # (1, S, H)
    typ = p["type_emb"][0][None, None]                  # token_type_ids == 0
    x = tok + pos + typ
    mu = x.mean(-1, keepdims=True)
    var = ((x - mu) ** 2).mean(-1, keepdims=True)
    return (x - mu) / jnp.sqrt(var + LN_EPS) * p["emb_ln_g"] + p["emb_ln_b"]


def sbert_forward(input_ids, attention_mask, params, num_heads):
    """BERT encoder -> masked mean pooling (== SBERTClassifierModel.forward, use_mean_pooling)."""
    x = bert_embed(input_ids, params)
    mask_f = attention_mask.astype(jnp.float32)
    mask_add = ((1.0 - mask_f) * -1e9)[:, None, :]      # (B, 1, S) additive attention mask
    return bert_encoder_pooled(x, mask_add, params["stack"], num_heads)   # (B, H)


def init_params(key, vocab, max_pos, H, F_, num_layers):
    keys = jax.random.split(key, 3 + num_layers)
    std = 0.02
    bf16 = jnp.bfloat16
    params = {
        "tok_emb": std * jax.random.normal(keys[0], (vocab, H), jnp.float32),
        "pos_emb": std * jax.random.normal(keys[1], (max_pos, H), jnp.float32),
        "type_emb": std * jax.random.normal(keys[2], (2, H), jnp.float32),
        "emb_ln_g": jnp.ones((H,), jnp.float32),
        "emb_ln_b": jnp.zeros((H,), jnp.float32),
    }
    layers = []
    for li in range(num_layers):
        lk = jax.random.split(keys[3 + li], 6)
        layers.append({
            # Weight matrices stored bf16 (MXU-native, half the HBM/VMEM bytes);
            # biases and LayerNorm params stay f32.
            "wq": (std * jax.random.normal(lk[0], (H, H), jnp.float32)).astype(bf16),
            "bq": jnp.zeros((1, H), jnp.float32),
            "wk": (std * jax.random.normal(lk[1], (H, H), jnp.float32)).astype(bf16),
            "bk": jnp.zeros((1, H), jnp.float32),
            "wv": (std * jax.random.normal(lk[2], (H, H), jnp.float32)).astype(bf16),
            "bv": jnp.zeros((1, H), jnp.float32),
            "wo": (std * jax.random.normal(lk[3], (H, H), jnp.float32)).astype(bf16),
            "bo": jnp.zeros((1, H), jnp.float32),
            "ln1_g": jnp.ones((1, H), jnp.float32),
            "ln1_b": jnp.zeros((1, H), jnp.float32),
            "w1": (std * jax.random.normal(lk[4], (H, F_), jnp.float32)).astype(bf16),
            "b1": jnp.zeros((1, F_), jnp.float32),
            "w2": (std * jax.random.normal(lk[5], (F_, H), jnp.float32)).astype(bf16),
            "b2": jnp.zeros((1, H), jnp.float32),
            "ln2_g": jnp.ones((1, H), jnp.float32),
            "ln2_b": jnp.zeros((1, H), jnp.float32),
        })
    # Stack per-layer params along a leading (NL, ...) axis for layer-indexed BlockSpecs.
    params["stack"] = {k: jnp.stack([lp[k] for lp in layers], axis=0) for k in layers[0]}
    return params


# ---------- pure-JAX reference (for correctness check only) ----------
def _ref_layer(x, mask_add, sp, li, num_heads):
    B, S, H = x.shape
    hd = H // num_heads
    f32 = lambda a: a.astype(jnp.float32)
    q = x @ f32(sp["wq"][li]) + sp["bq"][li]
    k = x @ f32(sp["wk"][li]) + sp["bk"][li]
    v = x @ f32(sp["wv"][li]) + sp["bv"][li]
    qh = q.reshape(B, S, num_heads, hd)
    kh = k.reshape(B, S, num_heads, hd)
    vh = v.reshape(B, S, num_heads, hd)
    s = jnp.einsum("bqhd,bkhd->bhqk", qh, kh) / math.sqrt(hd) + mask_add[:, None, :, :]
    pr = jax.nn.softmax(s, axis=-1)
    ctx = jnp.einsum("bhqk,bkhd->bqhd", pr, vh).reshape(B, S, H)
    attn = ctx @ f32(sp["wo"][li]) + sp["bo"][li]
    x1 = _layer_norm(x + attn, sp["ln1_g"][li], sp["ln1_b"][li])
    h = jax.nn.gelu(x1 @ f32(sp["w1"][li]) + sp["b1"][li])
    ff = h @ f32(sp["w2"][li]) + sp["b2"][li]
    return _layer_norm(x1 + ff, sp["ln2_g"][li], sp["ln2_b"][li])


def ref_forward(input_ids, attention_mask, params, num_heads):
    x = bert_embed(input_ids, params)
    mask_f = attention_mask.astype(jnp.float32)
    mask_add = ((1.0 - mask_f) * -1e9)[:, None, :]
    sp = params["stack"]
    for li in range(sp["wq"].shape[0]):
        x = _ref_layer(x, mask_add, sp, li, num_heads)
    me = mask_f[..., None]
    summed = jnp.sum(x * me, axis=1)
    denom = jnp.maximum(jnp.sum(me, axis=1), 1e-9)
    return summed / denom


if __name__ == "__main__":
    # Small synthetic BERT config: B=2, S=8, H=32, heads=2, FFN=64, 2 layers, vocab=100.
    B, S, H, NH, FFN, NL, VOCAB = 2, 8, 32, 2, 64, 2, 100

    key = jax.random.PRNGKey(0)
    kp, kid = jax.random.split(key)
    params = init_params(kp, VOCAB, S, H, FFN, NL)

    input_ids = jax.random.randint(kid, (B, S), 0, VOCAB, dtype=jnp.int32)
    attention_mask = jnp.array([[1, 1, 1, 1, 1, 1, 1, 1],
                                [1, 1, 1, 1, 1, 0, 0, 0]], dtype=jnp.int32)

    fwd = jax.jit(functools.partial(sbert_forward, num_heads=NH))
    emb = jax.block_until_ready(fwd(input_ids, attention_mask, params))

    assert emb.shape == (B, H)
    assert bool(jnp.all(jnp.isfinite(emb)))
    # Sanity: matches a pure-JAX f32 reference within bf16/approx-reciprocal tolerance.
    ref = ref_forward(input_ids, attention_mask, params, NH)
    assert bool(jnp.allclose(emb, ref, atol=5e-2, rtol=5e-2))
    print("KERNEL_OK")
</pallas_src>

<mosaic_0001>
module attributes {stable_mosaic.version = 11 : i64} {
  func.func @bert_stack_kernel(%arg0: i32, %arg1: i32, %arg2: memref<1x8x32xf32, #tpu.memory_space<vmem>>, %arg3: memref<1x1x8xf32, #tpu.memory_space<vmem>>, %arg4: memref<1x32x32xbf16, #tpu.memory_space<vmem>>, %arg5: memref<1x1x32xf32, #tpu.memory_space<vmem>>, %arg6: memref<1x32x32xbf16, #tpu.memory_space<vmem>>, %arg7: memref<1x1x32xf32, #tpu.memory_space<vmem>>, %arg8: memref<1x32x32xbf16, #tpu.memory_space<vmem>>, %arg9: memref<1x1x32xf32, #tpu.memory_space<vmem>>, %arg10: memref<1x32x32xbf16, #tpu.memory_space<vmem>>, %arg11: memref<1x1x32xf32, #tpu.memory_space<vmem>>, %arg12: memref<1x1x32xf32, #tpu.memory_space<vmem>>, %arg13: memref<1x1x32xf32, #tpu.memory_space<vmem>>, %arg14: memref<1x32x64xbf16, #tpu.memory_space<vmem>>, %arg15: memref<1x1x64xf32, #tpu.memory_space<vmem>>, %arg16: memref<1x64x32xbf16, #tpu.memory_space<vmem>>, %arg17: memref<1x1x32xf32, #tpu.memory_space<vmem>>, %arg18: memref<1x1x32xf32, #tpu.memory_space<vmem>>, %arg19: memref<1x1x32xf32, #tpu.memory_space<vmem>>, %arg20: memref<1x1x32xf32, #tpu.memory_space<vmem>>, %arg21: memref<8x32xf32, #tpu.memory_space<vmem>>, %arg22: memref<8x32xf32, #tpu.memory_space<vmem>>) attributes {dimension_semantics = [#tpu.dimension_semantics<parallel>, #tpu.dimension_semantics<arbitrary>], iteration_bounds = array<i64: 2, 2>, scalar_prefetch = 0 : i64, scratch_operands = 2 : i64, tpu.core_type = #tpu.core_type<tc>, window_params = [{transform_indices = @transform_0, window_bounds = array<i64: 1, 8, 32>}, {transform_indices = @transform_1, window_bounds = array<i64: 1, 1, 8>}, {transform_indices = @transform_2, window_bounds = array<i64: 1, 32, 32>}, {transform_indices = @transform_3, window_bounds = array<i64: 1, 1, 32>}, {transform_indices = @transform_4, window_bounds = array<i64: 1, 32, 32>}, {transform_indices = @transform_5, window_bounds = array<i64: 1, 1, 32>}, {transform_indices = @transform_6, window_bounds = array<i64: 1, 32, 32>}, {transform_indices = @transform_7, window_bounds = array<i64: 1, 1, 32>}, {transform_indices = @transform_8, window_bounds = array<i64: 1, 32, 32>}, {transform_indices = @transform_9, window_bounds = array<i64: 1, 1, 32>}, {transform_indices = @transform_10, window_bounds = array<i64: 1, 1, 32>}, {transform_indices = @transform_11, window_bounds = array<i64: 1, 1, 32>}, {transform_indices = @transform_12, window_bounds = array<i64: 1, 32, 64>}, {transform_indices = @transform_13, window_bounds = array<i64: 1, 1, 64>}, {transform_indices = @transform_14, window_bounds = array<i64: 1, 64, 32>}, {transform_indices = @transform_15, window_bounds = array<i64: 1, 1, 32>}, {transform_indices = @transform_16, window_bounds = array<i64: 1, 1, 32>}, {transform_indices = @transform_17, window_bounds = array<i64: 1, 1, 32>}, {transform_indices = @transform_18, window_bounds = array<i64: 1, 1, 32>}]} {
    %c0_i32 = arith.constant 0 : i32
    %0 = arith.cmpi eq, %arg1, %c0_i32 : i32
    %1 = arith.extui %0 : i1 to i32
    %c0_i32_0 = arith.constant 0 : i32
    %2 = arith.cmpi ne, %1, %c0_i32_0 : i32
    scf.if %2 {
      %c0_90 = arith.constant 0 : index
      %c0_91 = arith.constant 0 : index
      %c0_92 = arith.constant 0 : index
      %169 = vector.load %arg2[%c0_90, %c0_91, %c0_92] : memref<1x8x32xf32, #tpu.memory_space<vmem>>, vector<1x8x32xf32>
      %170 = vector.shape_cast %169 : vector<1x8x32xf32> to vector<8x32xf32>
      %c0_93 = arith.constant 0 : index
      %c0_94 = arith.constant 0 : index
      %171 = vector.load %arg21[%c0_93, %c0_94] : memref<8x32xf32, #tpu.memory_space<vmem>>, vector<8x32xf32>
      tpu.vector_store %arg21[%c0_93, %c0_94], %170 {strides = array<i32>} : memref<8x32xf32, #tpu.memory_space<vmem>>, vector<8x32xf32>,
    } else {
    }
    %c0 = arith.constant 0 : index
    %c0_1 = arith.constant 0 : index
    %3 = vector.load %arg21[%c0, %c0_1] : memref<8x32xf32, #tpu.memory_space<vmem>>, vector<8x32xf32>
    %c0_2 = arith.constant 0 : index
    %c0_3 = arith.constant 0 : index
    %c0_4 = arith.constant 0 : index
    %4 = vector.load %arg3[%c0_2, %c0_3, %c0_4] : memref<1x1x8xf32, #tpu.memory_space<vmem>>, vector<1x1x8xf32>
    %5 = vector.shape_cast %4 : vector<1x1x8xf32> to vector<1x8xf32>
    %6 = arith.truncf %3 : vector<8x32xf32> to vector<8x32xbf16>
    %c0_5 = arith.constant 0 : index
    %c0_6 = arith.constant 0 : index
    %c0_7 = arith.constant 0 : index
    %7 = vector.load %arg4[%c0_5, %c0_6, %c0_7] : memref<1x32x32xbf16, #tpu.memory_space<vmem>>, vector<1x32x32xbf16>
    %8 = vector.shape_cast %7 : vector<1x32x32xbf16> to vector<32x32xbf16>
    %cst = arith.constant dense<0.000000e+00> : vector<8x32xf32>
    %9 = tpu.matmul %6, %8, %cst {dimension_numbers = #tpu.dot_dimension_numbers<[1], [0], [0], [1], [0, 0, 1, 1], [], []>} : vector<8x32xbf16>, vector<32x32xbf16>, vector<8x32xf32> -> vector<8x32xf32>
    %c0_8 = arith.constant 0 : index
    %c0_9 = arith.constant 0 : index
    %c0_10 = arith.constant 0 : index
    %10 = vector.load %arg5[%c0_8, %c0_9, %c0_10] : memref<1x1x32xf32, #tpu.memory_space<vmem>>, vector<1x1x32xf32>
    %11 = vector.shape_cast %10 : vector<1x1x32xf32> to vector<1x32xf32>
    %12 = vector.broadcast %11 : vector<1x32xf32> to vector<8x32xf32>
    %13 = arith.addf %9, %12 : vector<8x32xf32>
    %c0_11 = arith.constant 0 : index
    %c0_12 = arith.constant 0 : index
    %c0_13 = arith.constant 0 : index
    %14 = vector.load %arg6[%c0_11, %c0_12, %c0_13] : memref<1x32x32xbf16, #tpu.memory_space<vmem>>, vector<1x32x32xbf16>
    %15 = vector.shape_cast %14 : vector<1x32x32xbf16> to vector<32x32xbf16>
    %cst_14 = arith.constant dense<0.000000e+00> : vector<8x32xf32>
    %16 = tpu.matmul %6, %15, %cst_14 {dimension_numbers = #tpu.dot_dimension_numbers<[1], [0], [0], [1], [0, 0, 1, 1], [], []>} : vector<8x32xbf16>, vector<32x32xbf16>, vector<8x32xf32> -> vector<8x32xf32>
    %c0_15 = arith.constant 0 : index
    %c0_16 = arith.constant 0 : index
    %c0_17 = arith.constant 0 : index
    %17 = vector.load %arg7[%c0_15, %c0_16, %c0_17] : memref<1x1x32xf32, #tpu.memory_space<vmem>>, vector<1x1x32xf32>
    %18 = vector.shape_cast %17 : vector<1x1x32xf32> to vector<1x32xf32>
    %19 = vector.broadcast %18 : vector<1x32xf32> to vector<8x32xf32>
    %20 = arith.addf %16, %19 : vector<8x32xf32>
    %c0_18 = arith.constant 0 : index
    %c0_19 = arith.constant 0 : index
    %c0_20 = arith.constant 0 : index
    %21 = vector.load %arg8[%c0_18, %c0_19, %c0_20] : memref<1x32x32xbf16, #tpu.memory_space<vmem>>, vector<1x32x32xbf16>
    %22 = vector.shape_cast %21 : vector<1x32x32xbf16> to vector<32x32xbf16>
    %cst_21 = arith.constant dense<0.000000e+00> : vector<8x32xf32>
    %23 = tpu.matmul %6, %22, %cst_21 {dimension_numbers = #tpu.dot_dimension_numbers<[1], [0], [0], [1], [0, 0, 1, 1], [], []>} : vector<8x32xbf16>, vector<32x32xbf16>, vector<8x32xf32> -> vector<8x32xf32>
    %c0_22 = arith.constant 0 : index
    %c0_23 = arith.constant 0 : index
    %c0_24 = arith.constant 0 : index
    %24 = vector.load %arg9[%c0_22, %c0_23, %c0_24] : memref<1x1x32xf32, #tpu.memory_space<vmem>>, vector<1x1x32xf32>
    %25 = vector.shape_cast %24 : vector<1x1x32xf32> to vector<1x32xf32>
    %26 = vector.broadcast %25 : vector<1x32xf32> to vector<8x32xf32>
    %27 = arith.addf %23, %26 : vector<8x32xf32>
    %28 = arith.truncf %13 : vector<8x32xf32> to vector<8x32xbf16>
    %29 = arith.truncf %20 : vector<8x32xf32> to vector<8x32xbf16>
    %30 = arith.truncf %27 : vector<8x32xf32> to vector<8x32xbf16>
    %31 = vector.shape_cast %5 : vector<1x8xf32> to vector<1x8xf32>
    %32 = vector.broadcast %31 : vector<1x8xf32> to vector<8x8xf32>
    %33 = vector.extract_strided_slice %28 {offsets = [0, 0], sizes = [8, 16], strides = [1, 1]} : vector<8x32xbf16> to vector<8x16xbf16>
    %34 = vector.extract_strided_slice %29 {offsets = [0, 0], sizes = [8, 16], strides = [1, 1]} : vector<8x32xbf16> to vector<8x16xbf16>
    %35 = vector.extract_strided_slice %30 {offsets = [0, 0], sizes = [8, 16], strides = [1, 1]} : vector<8x32xbf16> to vector<8x16xbf16>
    %cst_25 = arith.constant dense<0.000000e+00> : vector<8x8xf32>
    %36 = tpu.matmul %33, %34, %cst_25 {dimension_numbers = #tpu.dot_dimension_numbers<[1], [1], [0], [0], [0, 0, 1, 0], [], []>} : vector<8x16xbf16>, vector<8x16xbf16>, vector<8x8xf32> -> vector<8x8xf32>
    %cst_26 = arith.constant 2.500000e-01 : f32
    %37 = vector.broadcast %cst_26 : f32 to vector<8x8xf32>
    %38 = arith.mulf %36, %37 : vector<8x8xf32>
    %39 = arith.addf %38, %32 : vector<8x8xf32>
    %cst_27 = arith.constant dense<0xFF800000> : vector<8xf32>
    %40 = vector.multi_reduction <maximumf>, %39, %cst_27 [1] : vector<8x8xf32> to vector<8xf32>
    %41 = vector.shape_cast %40 : vector<8xf32> to vector<8x1xf32>
    %42 = vector.broadcast %41 : vector<8x1xf32> to vector<8x8xf32>
    %43 = arith.subf %39, %42 : vector<8x8xf32>
    %44 = math.exp %43 : vector<8x8xf32>
    %cst_28 = arith.constant dense<0.000000e+00> : vector<8xf32>
    %45 = vector.multi_reduction <add>, %44, %cst_28 [1] : vector<8x8xf32> to vector<8xf32>
    %46 = vector.shape_cast %45 : vector<8xf32> to vector<8x1xf32>
    %47 = tpu.reciprocal %46 {approx = true} : vector<8x1xf32> -> vector<8x1xf32>
    %48 = vector.broadcast %47 : vector<8x1xf32> to vector<8x8xf32>
    %49 = arith.mulf %44, %48 : vector<8x8xf32>
    %50 = arith.truncf %49 : vector<8x8xf32> to vector<8x8xbf16>
    %cst_29 = arith.constant dense<0.000000e+00> : vector<8x16xf32>
    %51 = tpu.matmul %50, %35, %cst_29 {dimension_numbers = #tpu.dot_dimension_numbers<[1], [0], [0], [1], [0, 0, 1, 1], [], []>} : vector<8x8xbf16>, vector<8x16xbf16>, vector<8x16xf32> -> vector<8x16xf32>
    %c0_30 = arith.constant 0 : index
    %c0_31 = arith.constant 0 : index
    %52 = vector.load %arg22[%c0_30, %c0_31] : memref<8x32xf32, #tpu.memory_space<vmem>>, vector<8x16xf32>
    tpu.vector_store %arg22[%c0_30, %c0_31], %51 {strides = array<i32>} : memref<8x32xf32, #tpu.memory_space<vmem>>, vector<8x16xf32>,
    %53 = vector.extract_strided_slice %28 {offsets = [0, 16], sizes = [8, 16], strides = [1, 1]} : vector<8x32xbf16> to vector<8x16xbf16>
    %54 = vector.extract_strided_slice %29 {offsets = [0, 16], sizes = [8, 16], strides = [1, 1]} : vector<8x32xbf16> to vector<8x16xbf16>
    %55 = vector.extract_strided_slice %30 {offsets = [0, 16], sizes = [8, 16], strides = [1, 1]} : vector<8x32xbf16> to vector<8x16xbf16>
    %cst_32 = arith.constant dense<0.000000e+00> : vector<8x8xf32>
    %56 = tpu.matmul %53, %54, %cst_32 {dimension_numbers = #tpu.dot_dimension_numbers<[1], [1], [0], [0], [0, 0, 1, 0], [], []>} : vector<8x16xbf16>, vector<8x16xbf16>, vector<8x8xf32> -> vector<8x8xf32>
    %cst_33 = arith.constant 2.500000e-01 : f32
    %57 = vector.broadcast %cst_33 : f32 to vector<8x8xf32>
    %58 = arith.mulf %56, %57 : vector<8x8xf32>
    %59 = arith.addf %58, %32 : vector<8x8xf32>
    %cst_34 = arith.constant dense<0xFF800000> : vector<8xf32>
    %60 = vector.multi_reduction <maximumf>, %59, %cst_34 [1] : vector<8x8xf32> to vector<8xf32>
    %61 = vector.shape_cast %60 : vector<8xf32> to vector<8x1xf32>
    %62 = vector.broadcast %61 : vector<8x1xf32> to vector<8x8xf32>
    %63 = arith.subf %59, %62 : vector<8x8xf32>
    %64 = math.exp %63 : vector<8x8xf32>
    %cst_35 = arith.constant dense<0.000000e+00> : vector<8xf32>
    %65 = vector.multi_reduction <add>, %64, %cst_35 [1] : vector<8x8xf32> to vector<8xf32>
    %66 = vector.shape_cast %65 : vector<8xf32> to vector<8x1xf32>
    %67 = tpu.reciprocal %66 {approx = true} : vector<8x1xf32> -> vector<8x1xf32>
    %68 = vector.broadcast %67 : vector<8x1xf32> to vector<8x8xf32>
    %69 = arith.mulf %64, %68 : vector<8x8xf32>
    %70 = arith.truncf %69 : vector<8x8xf32> to vector<8x8xbf16>
    %cst_36 = arith.constant dense<0.000000e+00> : vector<8x16xf32>
    %71 = tpu.matmul %70, %55, %cst_36 {dimension_numbers = #tpu.dot_dimension_numbers<[1], [0], [0], [1], [0, 0, 1, 1], [], []>} : vector<8x8xbf16>, vector<8x16xbf16>, vector<8x16xf32> -> vector<8x16xf32>
    %c0_37 = arith.constant 0 : index
    %c16 = arith.constant 16 : index
    %72 = vector.load %arg22[%c0_37, %c16] : memref<8x32xf32, #tpu.memory_space<vmem>>, vector<8x16xf32>
    tpu.vector_store %arg22[%c0_37, %c16], %71 {strides = array<i32>} : memref<8x32xf32, #tpu.memory_space<vmem>>, vector<8x16xf32>,
    %c0_38 = arith.constant 0 : index
    %c0_39 = arith.constant 0 : index
    %73 = vector.load %arg22[%c0_38, %c0_39] : memref<8x32xf32, #tpu.memory_space<vmem>>, vector<8x32xf32>
    %74 = arith.truncf %73 : vector<8x32xf32> to vector<8x32xbf16>
    %c0_40 = arith.constant 0 : index
    %c0_41 = arith.constant 0 : index
    %c0_42 = arith.constant 0 : index
    %75 = vector.load %arg10[%c0_40, %c0_41, %c0_42] : memref<1x32x32xbf16, #tpu.memory_space<vmem>>, vector<1x32x32xbf16>
    %76 = vector.shape_cast %75 : vector<1x32x32xbf16> to vector<32x32xbf16>
    %cst_43 = arith.constant dense<0.000000e+00> : vector<8x32xf32>
    %77 = tpu.matmul %74, %76, %cst_43 {dimension_numbers = #tpu.dot_dimension_numbers<[1], [0], [0], [1], [0, 0, 1, 1], [], []>} : vector<8x32xbf16>, vector<32x32xbf16>, vector<8x32xf32> -> vector<8x32xf32>
    %c0_44 = arith.constant 0 : index
    %c0_45 = arith.constant 0 : index
    %c0_46 = arith.constant 0 : index
    %78 = vector.load %arg11[%c0_44, %c0_45, %c0_46] : memref<1x1x32xf32, #tpu.memory_space<vmem>>, vector<1x1x32xf32>
    %79 = vector.shape_cast %78 : vector<1x1x32xf32> to vector<1x32xf32>
    %80 = vector.broadcast %79 : vector<1x32xf32> to vector<8x32xf32>
    %81 = arith.addf %77, %80 : vector<8x32xf32>
    %82 = arith.addf %3, %81 : vector<8x32xf32>
    %c0_47 = arith.constant 0 : index
    %c0_48 = arith.constant 0 : index
    %c0_49 = arith.constant 0 : index
    %83 = vector.load %arg12[%c0_47, %c0_48, %c0_49] : memref<1x1x32xf32, #tpu.memory_space<vmem>>, vector<1x1x32xf32>
    %84 = vector.shape_cast %83 : vector<1x1x32xf32> to vector<1x32xf32>
    %c0_50 = arith.constant 0 : index
    %c0_51 = arith.constant 0 : index
    %c0_52 = arith.constant 0 : index
    %85 = vector.load %arg13[%c0_50, %c0_51, %c0_52] : memref<1x1x32xf32, #tpu.memory_space<vmem>>, vector<1x1x32xf32>
    %86 = vector.shape_cast %85 : vector<1x1x32xf32> to vector<1x32xf32>
    %cst_53 = arith.constant dense<0.000000e+00> : vector<8xf32>
    %87 = vector.multi_reduction <add>, %82, %cst_53 [1] : vector<8x32xf32> to vector<8xf32>
    %88 = vector.shape_cast %87 : vector<8xf32> to vector<8x1xf32>
    %cst_54 = arith.constant 3.200000e+01 : f32
    %89 = vector.broadcast %cst_54 : f32 to vector<8x1xf32>
    %90 = arith.divf %88, %89 : vector<8x1xf32>
    %91 = vector.broadcast %90 : vector<8x1xf32> to vector<8x32xf32>
    %92 = arith.subf %82, %91 : vector<8x32xf32>
    %93 = arith.mulf %92, %92 : vector<8x32xf32>
    %cst_55 = arith.constant dense<0.000000e+00> : vector<8xf32>
    %94 = vector.multi_reduction <add>, %93, %cst_55 [1] : vector<8x32xf32> to vector<8xf32>
    %95 = vector.shape_cast %94 : vector<8xf32> to vector<8x1xf32>
    %cst_56 = arith.constant 3.200000e+01 : f32
    %96 = vector.broadcast %cst_56 : f32 to vector<8x1xf32>
    %97 = arith.divf %95, %96 : vector<8x1xf32>
    %98 = vector.broadcast %90 : vector<8x1xf32> to vector<8x32xf32>
    %99 = arith.subf %82, %98 : vector<8x32xf32>
    %cst_57 = arith.constant 9.99999996E-13 : f32
    %100 = vector.broadcast %cst_57 : f32 to vector<8x1xf32>
    %101 = arith.addf %97, %100 : vector<8x1xf32>
    %102 = math.rsqrt %101 : vector<8x1xf32>
    %103 = vector.broadcast %102 : vector<8x1xf32> to vector<8x32xf32>
    %104 = arith.mulf %99, %103 : vector<8x32xf32>
    %105 = vector.broadcast %84 : vector<1x32xf32> to vector<8x32xf32>
    %106 = arith.mulf %104, %105 : vector<8x32xf32>
    %107 = vector.broadcast %86 : vector<1x32xf32> to vector<8x32xf32>
    %108 = arith.addf %106, %107 : vector<8x32xf32>
    %109 = arith.truncf %108 : vector<8x32xf32> to vector<8x32xbf16>
    %c0_58 = arith.constant 0 : index
    %c0_59 = arith.constant 0 : index
    %c0_60 = arith.constant 0 : index
    %110 = vector.load %arg14[%c0_58, %c0_59, %c0_60] : memref<1x32x64xbf16, #tpu.memory_space<vmem>>, vector<1x32x64xbf16>
    %111 = vector.shape_cast %110 : vector<1x32x64xbf16> to vector<32x64xbf16>
    %cst_61 = arith.constant dense<0.000000e+00> : vector<8x64xf32>
    %112 = tpu.matmul %109, %111, %cst_61 {dimension_numbers = #tpu.dot_dimension_numbers<[1], [0], [0], [1], [0, 0, 1, 1], [], []>} : vector<8x32xbf16>, vector<32x64xbf16>, vector<8x64xf32> -> vector<8x64xf32>
    %c0_62 = arith.constant 0 : index
    %c0_63 = arith.constant 0 : index
    %c0_64 = arith.constant 0 : index
    %113 = vector.load %arg15[%c0_62, %c0_63, %c0_64] : memref<1x1x64xf32, #tpu.memory_space<vmem>>, vector<1x1x64xf32>
    %114 = vector.shape_cast %113 : vector<1x1x64xf32> to vector<1x64xf32>
    %115 = vector.broadcast %114 : vector<1x64xf32> to vector<8x64xf32>
    %116 = arith.addf %112, %115 : vector<8x64xf32>
    %117 = arith.mulf %116, %116 : vector<8x64xf32>
    %118 = arith.mulf %116, %117 : vector<8x64xf32>
    %cst_65 = arith.constant 4.471500e-02 : f32
    %119 = vector.broadcast %cst_65 : f32 to vector<8x64xf32>
    %120 = arith.mulf %119, %118 : vector<8x64xf32>
    %121 = arith.addf %116, %120 : vector<8x64xf32>
    %cst_66 = arith.constant 0.797884583 : f32
    %122 = vector.broadcast %cst_66 : f32 to vector<8x64xf32>
    %123 = arith.mulf %122, %121 : vector<8x64xf32>
    %124 = math.tanh %123 : vector<8x64xf32>
    %cst_67 = arith.constant 1.000000e+00 : f32
    %125 = vector.broadcast %cst_67 : f32 to vector<8x64xf32>
    %126 = arith.addf %125, %124 : vector<8x64xf32>
    %cst_68 = arith.constant 5.000000e-01 : f32
    %127 = vector.broadcast %cst_68 : f32 to vector<8x64xf32>
    %128 = arith.mulf %127, %126 : vector<8x64xf32>
    %129 = arith.mulf %116, %128 : vector<8x64xf32>
    %130 = arith.truncf %129 : vector<8x64xf32> to vector<8x64xbf16>
    %c0_69 = arith.constant 0 : index
    %c0_70 = arith.constant 0 : index
    %c0_71 = arith.constant 0 : index
    %131 = vector.load %arg16[%c0_69, %c0_70, %c0_71] : memref<1x64x32xbf16, #tpu.memory_space<vmem>>, vector<1x64x32xbf16>
    %132 = vector.shape_cast %131 : vector<1x64x32xbf16> to vector<64x32xbf16>
    %cst_72 = arith.constant dense<0.000000e+00> : vector<8x32xf32>
    %133 = tpu.matmul %130, %132, %cst_72 {dimension_numbers = #tpu.dot_dimension_numbers<[1], [0], [0], [1], [0, 0, 1, 1], [], []>} : vector<8x64xbf16>, vector<64x32xbf16>, vector<8x32xf32> -> vector<8x32xf32>
    %c0_73 = arith.constant 0 : index
    %c0_74 = arith.constant 0 : index
    %c0_75 = arith.constant 0 : index
    %134 = vector.load %arg17[%c0_73, %c0_74, %c0_75] : memref<1x1x32xf32, #tpu.memory_space<vmem>>, vector<1x1x32xf32>
    %135 = vector.shape_cast %134 : vector<1x1x32xf32> to vector<1x32xf32>
    %136 = vector.broadcast %135 : vector<1x32xf32> to vector<8x32xf32>
    %137 = arith.addf %133, %136 : vector<8x32xf32>
    %138 = arith.addf %108, %137 : vector<8x32xf32>
    %c0_76 = arith.constant 0 : index
    %c0_77 = arith.constant 0 : index
    %c0_78 = arith.constant 0 : index
    %139 = vector.load %arg18[%c0_76, %c0_77, %c0_78] : memref<1x1x32xf32, #tpu.memory_space<vmem>>, vector<1x1x32xf32>
    %140 = vector.shape_cast %139 : vector<1x1x32xf32> to vector<1x32xf32>
    %c0_79 = arith.constant 0 : index
    %c0_80 = arith.constant 0 : index
    %c0_81 = arith.constant 0 : index
    %141 = vector.load %arg19[%c0_79, %c0_80, %c0_81] : memref<1x1x32xf32, #tpu.memory_space<vmem>>, vector<1x1x32xf32>
    %142 = vector.shape_cast %141 : vector<1x1x32xf32> to vector<1x32xf32>
    %cst_82 = arith.constant dense<0.000000e+00> : vector<8xf32>
    %143 = vector.multi_reduction <add>, %138, %cst_82 [1] : vector<8x32xf32> to vector<8xf32>
    %144 = vector.shape_cast %143 : vector<8xf32> to vector<8x1xf32>
    %cst_83 = arith.constant 3.200000e+01 : f32
    %145 = vector.broadcast %cst_83 : f32 to vector<8x1xf32>
    %146 = arith.divf %144, %145 : vector<8x1xf32>
    %147 = vector.broadcast %146 : vector<8x1xf32> to vector<8x32xf32>
    %148 = arith.subf %138, %147 : vector<8x32xf32>
    %149 = arith.mulf %148, %148 : vector<8x32xf32>
    %cst_84 = arith.constant dense<0.000000e+00> : vector<8xf32>
    %150 = vector.multi_reduction <add>, %149, %cst_84 [1] : vector<8x32xf32> to vector<8xf32>
    %151 = vector.shape_cast %150 : vector<8xf32> to vector<8x1xf32>
    %cst_85 = arith.constant 3.200000e+01 : f32
    %152 = vector.broadcast %cst_85 : f32 to vector<8x1xf32>
    %153 = arith.divf %151, %152 : vector<8x1xf32>
    %154 = vector.broadcast %146 : vector<8x1xf32> to vector<8x32xf32>
    %155 = arith.subf %138, %154 : vector<8x32xf32>
    %cst_86 = arith.constant 9.99999996E-13 : f32
    %156 = vector.broadcast %cst_86 : f32 to vector<8x1xf32>
    %157 = arith.addf %153, %156 : vector<8x1xf32>
    %158 = math.rsqrt %157 : vector<8x1xf32>
    %159 = vector.broadcast %158 : vector<8x1xf32> to vector<8x32xf32>
    %160 = arith.mulf %155, %159 : vector<8x32xf32>
    %161 = vector.broadcast %140 : vector<1x32xf32> to vector<8x32xf32>
    %162 = arith.mulf %160, %161 : vector<8x32xf32>
    %163 = vector.broadcast %142 : vector<1x32xf32> to vector<8x32xf32>
    %164 = arith.addf %162, %163 : vector<8x32xf32>
    %c0_87 = arith.constant 0 : index
    %c0_88 = arith.constant 0 : index
    %165 = vector.load %arg21[%c0_87, %c0_88] : memref<8x32xf32, #tpu.memory_space<vmem>>, vector<8x32xf32>
    tpu.vector_store %arg21[%c0_87, %c0_88], %164 {strides = array<i32>} : memref<8x32xf32, #tpu.memory_space<vmem>>, vector<8x32xf32>,
    %c1_i32 = arith.constant 1 : i32
    %166 = arith.cmpi eq, %arg1, %c1_i32 : i32
    %167 = arith.extui %166 : i1 to i32
    %c0_i32_89 = arith.constant 0 : i32
    %168 = arith.cmpi ne, %167, %c0_i32_89 : i32
    scf.if %168 {
      %cst_90 = arith.constant -5.000000e-01 : f32
      %169 = vector.broadcast %cst_90 : f32 to vector<1x8xf32>
      %170 = arith.cmpf oge, %5, %169 : vector<1x8xf32>
      %171 = arith.extui %170 : vector<1x8xi1> to vector<1x8xi32>
      %172 = arith.sitofp %171 : vector<1x8xi32> to vector<1x8xf32>
      %cst_91 = arith.constant dense<0.000000e+00> : vector<1x32xf32>
      %173 = tpu.matmul %172, %164, %cst_91 {dimension_numbers = #tpu.dot_dimension_numbers<[1], [0], [0], [1], [0, 0, 1, 1], [], []>} : vector<1x8xf32>, vector<8x32xf32>, vector<1x32xf32> -> vector<1x32xf32>
      %cst_92 = arith.constant dense<0.000000e+00> : vector<1xf32>
      %174 = vector.multi_reduction <add>, %172, %cst_92 [1] : vector<1x8xf32> to vector<1xf32>
      %175 = vector.shape_cast %174 : vector<1xf32> to vector<1x1xf32>
      %cst_93 = arith.constant 9.99999971E-10 : f32
      %176 = vector.broadcast %cst_93 : f32 to vector<1x1xf32>
      %177 = arith.maximumf %175, %176 : vector<1x1xf32>
      %178 = vector.broadcast %177 : vector<1x1xf32> to vector<1x32xf32>
      %179 = arith.divf %173, %178 : vector<1x32xf32>
      %c0_94 = arith.constant 0 : index
      %c0_95 = arith.constant 0 : index
      %c0_96 = arith.constant 0 : index
      %180 = vector.load %arg20[%c0_94, %c0_95, %c0_96] : memref<1x1x32xf32, #tpu.memory_space<vmem>>, vector<1x1x32xf32>
      %181 = vector.shape_cast %180 : vector<1x1x32xf32> to vector<1x32xf32>
      %182 = vector.shape_cast %179 : vector<1x32xf32> to vector<1x1x32xf32>
      tpu.vector_store %arg20[%c0_94, %c0_95, %c0_96], %182 {strides = array<i32>} : memref<1x1x32xf32, #tpu.memory_space<vmem>>, vector<1x1x32xf32>,
    } else {
    }
    return
  }
  func.func @transform_0(%arg0: i32, %arg1: i32) -> (i32, i32, i32) {
    %c0_i32 = arith.constant 0 : i32
    %c0_i32_0 = arith.constant 0 : i32
    %c0_i32_1 = arith.constant 0 : i32
    return %arg0, %c0_i32, %c0_i32_0 : i32, i32, i32
  }
  func.func @transform_1(%arg0: i32, %arg1: i32) -> (i32, i32, i32) {
    %c0_i32 = arith.constant 0 : i32
    %c0_i32_0 = arith.constant 0 : i32
    %c0_i32_1 = arith.constant 0 : i32
    return %arg0, %c0_i32, %c0_i32_0 : i32, i32, i32
  }
  func.func @transform_2(%arg0: i32, %arg1: i32) -> (i32, i32, i32) {
    %c0_i32 = arith.constant 0 : i32
    %c0_i32_0 = arith.constant 0 : i32
    %c0_i32_1 = arith.constant 0 : i32
    return %arg1, %c0_i32, %c0_i32_0 : i32, i32, i32
  }
  func.func @transform_3(%arg0: i32, %arg1: i32) -> (i32, i32, i32) {
    %c0_i32 = arith.constant 0 : i32
    %c0_i32_0 = arith.constant 0 : i32
    %c0_i32_1 = arith.constant 0 : i32
    return %arg1, %c0_i32, %c0_i32_0 : i32, i32, i32
  }
  func.func @transform_4(%arg0: i32, %arg1: i32) -> (i32, i32, i32) {
    %c0_i32 = arith.constant 0 : i32
    %c0_i32_0 = arith.constant 0 : i32
    %c0_i32_1 = arith.constant 0 : i32
    return %arg1, %c0_i32, %c0_i32_0 : i32, i32, i32
  }
  func.func @transform_5(%arg0: i32, %arg1: i32) -> (i32, i32, i32) {
    %c0_i32 = arith.constant 0 : i32
    %c0_i32_0 = arith.constant 0 : i32
    %c0_i32_1 = arith.constant 0 : i32
    return %arg1, %c0_i32, %c0_i32_0 : i32, i32, i32
  }
  func.func @transform_6(%arg0: i32, %arg1: i32) -> (i32, i32, i32) {
    %c0_i32 = arith.constant 0 : i32
    %c0_i32_0 = arith.constant 0 : i32
    %c0_i32_1 = arith.constant 0 : i32
    return %arg1, %c0_i32, %c0_i32_0 : i32, i32, i32
  }
  func.func @transform_7(%arg0: i32, %arg1: i32) -> (i32, i32, i32) {
    %c0_i32 = arith.constant 0 : i32
    %c0_i32_0 = arith.constant 0 : i32
    %c0_i32_1 = arith.constant 0 : i32
    return %arg1, %c0_i32, %c0_i32_0 : i32, i32, i32
  }
  func.func @transform_8(%arg0: i32, %arg1: i32) -> (i32, i32, i32) {
    %c0_i32 = arith.constant 0 : i32
    %c0_i32_0 = arith.constant 0 : i32
    %c0_i32_1 = arith.constant 0 : i32
    return %arg1, %c0_i32, %c0_i32_0 : i32, i32, i32
  }
  func.func @transform_9(%arg0: i32, %arg1: i32) -> (i32, i32, i32) {
    %c0_i32 = arith.constant 0 : i32
    %c0_i32_0 = arith.constant 0 : i32
    %c0_i32_1 = arith.constant 0 : i32
    return %arg1, %c0_i32, %c0_i32_0 : i32, i32, i32
  }
  func.func @transform_10(%arg0: i32, %arg1: i32) -> (i32, i32, i32) {
    %c0_i32 = arith.constant 0 : i32
    %c0_i32_0 = arith.constant 0 : i32
    %c0_i32_1 = arith.constant 0 : i32
    return %arg1, %c0_i32, %c0_i32_0 : i32, i32, i32
  }
  func.func @transform_11(%arg0: i32, %arg1: i32) -> (i32, i32, i32) {
    %c0_i32 = arith.constant 0 : i32
    %c0_i32_0 = arith.constant 0 : i32
    %c0_i32_1 = arith.constant 0 : i32
    return %arg1, %c0_i32, %c0_i32_0 : i32, i32, i32
  }
  func.func @transform_12(%arg0: i32, %arg1: i32) -> (i32, i32, i32) {
    %c0_i32 = arith.constant 0 : i32
    %c0_i32_0 = arith.constant 0 : i32
    %c0_i32_1 = arith.constant 0 : i32
    return %arg1, %c0_i32, %c0_i32_0 : i32, i32, i32
  }
  func.func @transform_13(%arg0: i32, %arg1: i32) -> (i32, i32, i32) {
    %c0_i32 = arith.constant 0 : i32
    %c0_i32_0 = arith.constant 0 : i32
    %c0_i32_1 = arith.constant 0 : i32
    return %arg1, %c0_i32, %c0_i32_0 : i32, i32, i32
  }
  func.func @transform_14(%arg0: i32, %arg1: i32) -> (i32, i32, i32) {
    %c0_i32 = arith.constant 0 : i32
    %c0_i32_0 = arith.constant 0 : i32
    %c0_i32_1 = arith.constant 0 : i32
    return %arg1, %c0_i32, %c0_i32_0 : i32, i32, i32
  }
  func.func @transform_15(%arg0: i32, %arg1: i32) -> (i32, i32, i32) {
    %c0_i32 = arith.constant 0 : i32
    %c0_i32_0 = arith.constant 0 : i32
    %c0_i32_1 = arith.constant 0 : i32
    return %arg1, %c0_i32, %c0_i32_0 : i32, i32, i32
  }
  func.func @transform_16(%arg0: i32, %arg1: i32) -> (i32, i32, i32) {
    %c0_i32 = arith.constant 0 : i32
    %c0_i32_0 = arith.constant 0 : i32
    %c0_i32_1 = arith.constant 0 : i32
    return %arg1, %c0_i32, %c0_i32_0 : i32, i32, i32
  }
  func.func @transform_17(%arg0: i32, %arg1: i32) -> (i32, i32, i32) {
    %c0_i32 = arith.constant 0 : i32
    %c0_i32_0 = arith.constant 0 : i32
    %c0_i32_1 = arith.constant 0 : i32
    return %arg1, %c0_i32, %c0_i32_0 : i32, i32, i32
  }
  func.func @transform_18(%arg0: i32, %arg1: i32) -> (i32, i32, i32) {
    %c0_i32 = arith.constant 0 : i32
    %c0_i32_0 = arith.constant 0 : i32
    %c0_i32_1 = arith.constant 0 : i32
    return %arg0, %c0_i32, %c0_i32_0 : i32, i32, i32
  }
}

</mosaic_0001>

<llo_original>
// kernel: sbert_forward.1
$region0: #{sbert_forward.1}
  #allocation0 [shape = 'u32[]', space=smem, size = 0x4, offset = 0x4, fixed_abs, tag = 'smem constant byte address 0x4 - core index']
  #allocation1 [shape = 'u32[72,128]{1,0:T(1,128)}', space=vmem, size = 0x9000, scoped, tag = 'internal scratch']
  #allocation2 [shape = 'f32[8,32]{1,0:T(8,128)}', space=vmem, size = 0x1000, scoped, tag = 'scratch operand']
  #allocation3 [shape = 'f32[8,32]{1,0:T(8,128)}', space=vmem, size = 0x1000, scoped, tag = 'scratch operand']
  %s0 = inlined_call_operand.vmem [shape: f32[2,8,32], index: 0, kind: input, shape index: {}]
  %s1 = inlined_call_operand.vmem [shape: f32[2,1,8], index: 1, kind: input, shape index: {}]
  %s2 = inlined_call_operand.vmem [shape: bf16[2,32,32], index: 2, kind: input, shape index: {}]
  %s3 = inlined_call_operand.vmem [shape: f32[2,1,32], index: 3, kind: input, shape index: {}]
  %s4 = inlined_call_operand.vmem [shape: bf16[2,32,32], index: 4, kind: input, shape index: {}]
  %s5 = inlined_call_operand.vmem [shape: f32[2,1,32], index: 5, kind: input, shape index: {}]
  %s6 = inlined_call_operand.vmem [shape: bf16[2,32,32], index: 6, kind: input, shape index: {}]
  %s7 = inlined_call_operand.vmem [shape: f32[2,1,32], index: 7, kind: input, shape index: {}]
  %s8 = inlined_call_operand.vmem [shape: bf16[2,32,32], index: 8, kind: input, shape index: {}]
  %s9 = inlined_call_operand.vmem [shape: f32[2,1,32], index: 9, kind: input, shape index: {}]
  %s10 = inlined_call_operand.vmem [shape: f32[2,1,32], index: 10, kind: input, shape index: {}]
  %s11 = inlined_call_operand.vmem [shape: f32[2,1,32], index: 11, kind: input, shape index: {}]
  %s12 = inlined_call_operand.vmem [shape: bf16[2,32,64], index: 12, kind: input, shape index: {}]
  %s13 = inlined_call_operand.vmem [shape: f32[2,1,64], index: 13, kind: input, shape index: {}]
  %s14 = inlined_call_operand.vmem [shape: bf16[2,64,32], index: 14, kind: input, shape index: {}]
  %s15 = inlined_call_operand.vmem [shape: f32[2,1,32], index: 15, kind: input, shape index: {}]
  %s16 = inlined_call_operand.vmem [shape: f32[2,1,32], index: 16, kind: input, shape index: {}]
  %s17 = inlined_call_operand.vmem [shape: f32[2,1,32], index: 17, kind: input, shape index: {}]
  %s18 = inlined_call_operand.hbm [shape: f32[2,1,32], index: 18, kind: output, shape index: {}]
  %s19 = sld [smem:[#allocation0]]
  $region113: #{sbert_forward.1} parent=0
    _
  %s21 = ssub.s32 1, %s19
  %s22 = scalar_select 0, %s21, %s19
  $region1: #{sbert_forward.1} parent=0
    #allocation4 [shape = 'u8[1024]{0}', space=vmem, size = 0x400, scoped, tag = 'output window, operand 0']
    #allocation5 [shape = 's32[2]{0}', space=sflag, size = 0x8, scoped, tag = 'scoped memory for sbert_forward.1']
    %23 = vsyncpa [#allocation5], 0
    %s24 = scalar_lea.sflag [#allocation5], 1
    %25 = vsyncpa %s24, 0
    loop: start=0, step=1, limit=6
    $region2: #{sbert_forward.1} parent=1 // loop_pre_header
      _
    $region3: #{sbert_forward.1} parent=1 // loop_header
      %s27 = sphi 0, %s31
      %p28 = scmp.ge.s32.totalorder %s27, 6
      %s34 = sphi 0, %s46
      %s35 = sphi 0, %s42
      %s36 = sphi 0, %s34
      %s37 = sphi 0, %s35
      %s38 = sphi 0, %s36
      %s39 = sphi 0, %s37
      %s49 = sphi 0, %s51
      %s52 = sphi 0, %s49
      %s53 = sphi 0, %s52
      %s69 = sphi 0, %s53
      %s75 = sphi 0, %s77
      %s78 = sphi 0, %s75
      %s79 = sphi 0, %s78
      %s95 = sphi 0, %s79
      %s101 = sphi 0, %s103
      %s104 = sphi 0, %s101
      %s105 = sphi 0, %s104
      %s121 = sphi 0, %s105
      %s127 = sphi 0, %s129
      %s130 = sphi 0, %s127
      %s131 = sphi 0, %s130
      %s147 = sphi 0, %s131
      %s153 = sphi 0, %s155
      %s156 = sphi 0, %s153
      %s157 = sphi 0, %s156
      %s173 = sphi 0, %s157
      %s179 = sphi 0, %s181
      %s182 = sphi 0, %s179
      %s183 = sphi 0, %s182
      %s199 = sphi 0, %s183
      %s205 = sphi 0, %s207
      %s208 = sphi 0, %s205
      %s209 = sphi 0, %s208
      %s225 = sphi 0, %s209
      %s231 = sphi 0, %s233
      %s234 = sphi 0, %s231
      %s235 = sphi 0, %s234
      %s251 = sphi 0, %s235
      %s257 = sphi 0, %s259
      %s260 = sphi 0, %s257
      %s261 = sphi 0, %s260
      %s277 = sphi 0, %s261
      %s283 = sphi 0, %s285
      %s286 = sphi 0, %s283
      %s287 = sphi 0, %s286
      %s303 = sphi 0, %s287
      %s309 = sphi 0, %s311
      %s312 = sphi 0, %s309
      %s313 = sphi 0, %s312
      %s329 = sphi 0, %s313
      %s335 = sphi 0, %s337
      %s338 = sphi 0, %s335
      %s339 = sphi 0, %s338
      %s355 = sphi 0, %s339
      %s361 = sphi 0, %s363
      %s364 = sphi 0, %s361
      %s365 = sphi 0, %s364
      %s381 = sphi 0, %s365
      %s387 = sphi 0, %s389
      %s390 = sphi 0, %s387
      %s391 = sphi 0, %s390
      %s407 = sphi 0, %s391
      %s413 = sphi 0, %s415
      %s416 = sphi 0, %s413
      %s417 = sphi 0, %s416
      %s433 = sphi 0, %s417
      %s439 = sphi 0, %s441
      %s442 = sphi 0, %s439
      %s443 = sphi 0, %s442
      %s459 = sphi 0, %s443
      %s465 = sphi 0, %s467
      %s468 = sphi 0, %s465
      %s469 = sphi 0, %s468
      %s485 = sphi 0, %s469
      %s491 = sphi 0, %s493
      %s494 = sphi 0, %s491
      %s495 = sphi 0, %s494
      %s511 = sphi 0, %s495
      %s517 = sphi 0, %s519
      %s520 = sphi 0, %s517
      %s521 = sphi 0, %s520
      %s537 = sphi 0, %s521
    $region4: #{sbert_forward.1} parent=1 // loop_header_branch
      %30 = sbr.rel (%p28) target = $region8
    $region5: #{sbert_forward.1} parent=1 // loop_body
      %s32 = ssub.s32 %s27, 1
      %s33 = ssub.s32 %s27, 2
      %s40 = sadd.s32 1, %s35
      %p41 = scmp.ge.s32.totalorder %s40, 2
      %s42 = scalar_select %p41, 0, %s40
      %s43 = sadd.s32 1, %s34
      %s44 = scalar_select %p41, %s43, %s34
      %p45 = scmp.ge.s32.totalorder %s44, 2
      %s46 = scalar_select %p45, 0, %s44
      %s47 = ssub.s32 %s34, %s46
      %p48 = scmp.eq.s32.totalorder %s47, 0
      %s50 = sadd.s32 %s49, 1
      %s51 = scalar_select %p48, %s49, %s50
      %p54 = pneg %p48
      %p55 = scmp.eq.s32.totalorder %s27, 3
      %p56 = por %p54, %p55
      %p57 = scmp.ne.s32.totalorder %s49, %s52
      %p58 = scmp.eq.s32.totalorder %s27, 0
      %p59 = por %p57, %p58
      %p60 = scmp.ne.s32.totalorder %s49, %s52
      %p61 = scmp.eq.s32.totalorder %s32, 3
      %p62 = por %p60, %p61
      %p63 = scmp.ne.s32.totalorder %s52, %s53
      %p64 = scmp.eq.s32.totalorder %s32, 0
      %p65 = por %p63, %p64
      %p66 = scmp.ne.s32.totalorder %s52, %s53
      %p67 = scmp.eq.s32.totalorder %s33, 3
      %p68 = por %p66, %p67
      %p70 = scmp.ne.s32.totalorder %s53, %s69
      %p71 = scmp.eq.s32.totalorder %s33, 0
      %p72 = por %p70, %p71
      %s73 = ssub.s32 %s34, %s46
      %p74 = scmp.eq.s32.totalorder %s73, 0
      %s76 = sadd.s32 %s75, 1
      %s77 = scalar_select %p74, %s75, %s76
      %p80 = pneg %p74
      %p81 = scmp.eq.s32.totalorder %s27, 3
      %p82 = por %p80, %p81
      %p83 = scmp.ne.s32.totalorder %s75, %s78
      %p84 = scmp.eq.s32.totalorder %s27, 0
      %p85 = por %p83, %p84
      %p86 = scmp.ne.s32.totalorder %s75, %s78
      %p87 = scmp.eq.s32.totalorder %s32, 3
      %p88 = por %p86, %p87
      %p89 = scmp.ne.s32.totalorder %s78, %s79
      %p90 = scmp.eq.s32.totalorder %s32, 0
      %p91 = por %p89, %p90
      %p92 = scmp.ne.s32.totalorder %s78, %s79
      %p93 = scmp.eq.s32.totalorder %s33, 3
      %p94 = por %p92, %p93
      %p96 = scmp.ne.s32.totalorder %s79, %s95
      %p97 = scmp.eq.s32.totalorder %s33, 0
      %p98 = por %p96, %p97
      %s99 = ssub.s32 %s35, %s42
      %p100 = scmp.eq.s32.totalorder %s99, 0
      %s102 = sadd.s32 %s101, 1
      %s103 = scalar_select %p100, %s101, %s102
      %p106 = pneg %p100
      %p107 = scmp.eq.s32.totalorder %s27, 3
      %p108 = por %p106, %p107
      %p109 = scmp.ne.s32.totalorder %s101, %s104
      %p110 = scmp.eq.s32.totalorder %s27, 0
      %p111 = por %p109, %p110
      %p112 = scmp.ne.s32.totalorder %s101, %s104
      %p113 = scmp.eq.s32.totalorder %s32, 3
      %p114 = por %p112, %p113
      %p115 = scmp.ne.s32.totalorder %s104, %s105
      %p116 = scmp.eq.s32.totalorder %s32, 0
      %p117 = por %p115, %p116
      %p118 = scmp.ne.s32.totalorder %s104, %s105
      %p119 = scmp.eq.s32.totalorder %s33, 3
      %p120 = por %p118, %p119
      %p122 = scmp.ne.s32.totalorder %s105, %s121
      %p123 = scmp.eq.s32.totalorder %s33, 0
      %p124 = por %p122, %p123
      %s125 = ssub.s32 %s35, %s42
      %p126 = scmp.eq.s32.totalorder %s125, 0
      %s128 = sadd.s32 %s127, 1
      %s129 = scalar_select %p126, %s127, %s128
      %p132 = pneg %p126
      %p133 = scmp.eq.s32.totalorder %s27, 3
      %p134 = por %p132, %p133
      %p135 = scmp.ne.s32.totalorder %s127, %s130
      %p136 = scmp.eq.s32.totalorder %s27, 0
      %p137 = por %p135, %p136
      %p138 = scmp.ne.s32.totalorder %s127, %s130
      %p139 = scmp.eq.s32.totalorder %s32, 3
      %p140 = por %p138, %p139
      %p141 = scmp.ne.s32.totalorder %s130, %s131
      %p142 = scmp.eq.s32.totalorder %s32, 0
      %p143 = por %p141, %p142
      %p144 = scmp.ne.s32.totalorder %s130, %s131
      %p145 = scmp.eq.s32.totalorder %s33, 3
      %p146 = por %p144, %p145
      %p148 = scmp.ne.s32.totalorder %s131, %s147
      %p149 = scmp.eq.s32.totalorder %s33, 0
      %p150 = por %p148, %p149
      %s151 = ssub.s32 %s35, %s42
      %p152 = scmp.eq.s32.totalorder %s151, 0
      %s154 = sadd.s32 %s153, 1
      %s155 = scalar_select %p152, %s153, %s154
      %p158 = pneg %p152
      %p159 = scmp.eq.s32.totalorder %s27, 3
      %p160 = por %p158, %p159
      %p161 = scmp.ne.s32.totalorder %s153, %s156
      %p162 = scmp.eq.s32.totalorder %s27, 0
      %p163 = por %p161, %p162
      %p164 = scmp.ne.s32.totalorder %s153, %s156
      %p165 = scmp.eq.s32.totalorder %s32, 3
      %p166 = por %p164, %p165
      %p167 = scmp.ne.s32.totalorder %s156, %s157
      %p168 = scmp.eq.s32.totalorder %s32, 0
      %p169 = por %p167, %p168
      %p170 = scmp.ne.s32.totalorder %s156, %s157
      %p171 = scmp.eq.s32.totalorder %s33, 3
      %p172 = por %p170, %p171
      %p174 = scmp.ne.s32.totalorder %s157, %s173
      %p175 = scmp.eq.s32.totalorder %s33, 0
      %p176 = por %p174, %p175
      %s177 = ssub.s32 %s35, %s42
      %p178 = scmp.eq.s32.totalorder %s177, 0
      %s180 = sadd.s32 %s179, 1
      %s181 = scalar_select %p178, %s179, %s180
      %p184 = pneg %p178
      %p185 = scmp.eq.s32.totalorder %s27, 3
      %p186 = por %p184, %p185
      %p187 = scmp.ne.s32.totalorder %s179, %s182
      %p188 = scmp.eq.s32.totalorder %s27, 0
      %p189 = por %p187, %p188
      %p190 = scmp.ne.s32.totalorder %s179, %s182
      %p191 = scmp.eq.s32.totalorder %s32, 3
      %p192 = por %p190, %p191
      %p193 = scmp.ne.s32.totalorder %s182, %s183
      %p194 = scmp.eq.s32.totalorder %s32, 0
      %p195 = por %p193, %p194
      %p196 = scmp.ne.s32.totalorder %s182, %s183
      %p197 = scmp.eq.s32.totalorder %s33, 3
      %p198 = por %p196, %p197
      %p200 = scmp.ne.s32.totalorder %s183, %s199
      %p201 = scmp.eq.s32.totalorder %s33, 0
      %p202 = por %p200, %p201
      %s203 = ssub.s32 %s35, %s42
      %p204 = scmp.eq.s32.totalorder %s203, 0
      %s206 = sadd.s32 %s205, 1
      %s207 = scalar_select %p204, %s205, %s206
      %p210 = pneg %p204
      %p211 = scmp.eq.s32.totalorder %s27, 3
      %p212 = por %p210, %p211
      %p213 = scmp.ne.s32.totalorder %s205, %s208
      %p214 = scmp.eq.s32.totalorder %s27, 0
      %p215 = por %p213, %p214
      %p216 = scmp.ne.s32.totalorder %s205, %s208
      %p217 = scmp.eq.s32.totalorder %s32, 3
      %p218 = por %p216, %p217
      %p219 = scmp.ne.s32.totalorder %s208, %s209
      %p220 = scmp.eq.s32.totalorder %s32, 0
      %p221 = por %p219, %p220
      %p222 = scmp.ne.s32.totalorder %s208, %s209
      %p223 = scmp.eq.s32.totalorder %s33, 3
      %p224 = por %p222, %p223
      %p226 = scmp.ne.s32.totalorder %s209, %s225
      %p227 = scmp.eq.s32.totalorder %s33, 0
      %p228 = por %p226, %p227
      %s229 = ssub.s32 %s35, %s42
      %p230 = scmp.eq.s32.totalorder %s229, 0
      %s232 = sadd.s32 %s231, 1
      %s233 = scalar_select %p230, %s231, %s232
      %p236 = pneg %p230
      %p237 = scmp.eq.s32.totalorder %s27, 3
      %p238 = por %p236, %p237
      %p239 = scmp.ne.s32.totalorder %s231, %s234
      %p240 = scmp.eq.s32.totalorder %s27, 0
      %p241 = por %p239, %p240
      %p242 = scmp.ne.s32.totalorder %s231, %s234
      %p243 = scmp.eq.s32.totalorder %s32, 3
      %p244 = por %p242, %p243
      %p245 = scmp.ne.s32.totalorder %s234, %s235
      %p246 = scmp.eq.s32.totalorder %s32, 0
      %p247 = por %p245, %p246
      %p248 = scmp.ne.s32.totalorder %s234, %s235
      %p249 = scmp.eq.s32.totalorder %s33, 3
      %p250 = por %p248, %p249
      %p252 = scmp.ne.s32.totalorder %s235, %s251
      %p253 = scmp.eq.s32.totalorder %s33, 0
      %p254 = por %p252, %p253
      %s255 = ssub.s32 %s35, %s42
      %p256 = scmp.eq.s32.totalorder %s255, 0
      %s258 = sadd.s32 %s257, 1
      %s259 = scalar_select %p256, %s257, %s258
      %p262 = pneg %p256
      %p263 = scmp.eq.s32.totalorder %s27, 3
      %p264 = por %p262, %p263
      %p265 = scmp.ne.s32.totalorder %s257, %s260
      %p266 = scmp.eq.s32.totalorder %s27, 0
      %p267 = por %p265, %p266
      %p268 = scmp.ne.s32.totalorder %s257, %s260
      %p269 = scmp.eq.s32.totalorder %s32, 3
      %p270 = por %p268, %p269
      %p271 = scmp.ne.s32.totalorder %s260, %s261
      %p272 = scmp.eq.s32.totalorder %s32, 0
      %p273 = por %p271, %p272
      %p274 = scmp.ne.s32.totalorder %s260, %s261
      %p275 = scmp.eq.s32.totalorder %s33, 3
      %p276 = por %p274, %p275
      %p278 = scmp.ne.s32.totalorder %s261, %s277
      %p279 = scmp.eq.s32.totalorder %s33, 0
      %p280 = por %p278, %p279
      %s281 = ssub.s32 %s35, %s42
      %p282 = scmp.eq.s32.totalorder %s281, 0
      %s284 = sadd.s32 %s283, 1
      %s285 = scalar_select %p282, %s283, %s284
      %p288 = pneg %p282
      %p289 = scmp.eq.s32.totalorder %s27, 3
      %p290 = por %p288, %p289
      %p291 = scmp.ne.s32.totalorder %s283, %s286
      %p292 = scmp.eq.s32.totalorder %s27, 0
      %p293 = por %p291, %p292
      %p294 = scmp.ne.s32.totalorder %s283, %s286
      %p295 = scmp.eq.s32.totalorder %s32, 3
      %p296 = por %p294, %p295
      %p297 = scmp.ne.s32.totalorder %s286, %s287
      %p298 = scmp.eq.s32.totalorder %s32, 0
      %p299 = por %p297, %p298
      %p300 = scmp.ne.s32.totalorder %s286, %s287
      %p301 = scmp.eq.s32.totalorder %s33, 3
      %p302 = por %p300, %p301
      %p304 = scmp.ne.s32.totalorder %s287, %s303
      %p305 = scmp.eq.s32.totalorder %s33, 0
      %p306 = por %p304, %p305
      %s307 = ssub.s32 %s35, %s42
      %p308 = scmp.eq.s32.totalorder %s307, 0
      %s310 = sadd.s32 %s309, 1
      %s311 = scalar_select %p308, %s309, %s310
      %p314 = pneg %p308
      %p315 = scmp.eq.s32.totalorder %s27, 3
      %p316 = por %p314, %p315
      %p317 = scmp.ne.s32.totalorder %s309, %s312
      %p318 = scmp.eq.s32.totalorder %s27, 0
      %p319 = por %p317, %p318
      %p320 = scmp.ne.s32.totalorder %s309, %s312
      %p321 = scmp.eq.s32.totalorder %s32, 3
      %p322 = por %p320, %p321
      %p323 = scmp.ne.s32.totalorder %s312, %s313
      %p324 = scmp.eq.s32.totalorder %s32, 0
      %p325 = por %p323, %p324
      %p326 = scmp.ne.s32.totalorder %s312, %s313
      %p327 = scmp.eq.s32.totalorder %s33, 3
      %p328 = por %p326, %p327
      %p330 = scmp.ne.s32.totalorder %s313, %s329
      %p331 = scmp.eq.s32.totalorder %s33, 0
      %p332 = por %p330, %p331
      %s333 = ssub.s32 %s35, %s42
      %p334 = scmp.eq.s32.totalorder %s333, 0
      %s336 = sadd.s32 %s335, 1
      %s337 = scalar_select %p334, %s335, %s336
      %p340 = pneg %p334
      %p341 = scmp.eq.s32.totalorder %s27, 3
      %p342 = por %p340, %p341
      %p343 = scmp.ne.s32.totalorder %s335, %s338
      %p344 = scmp.eq.s32.totalorder %s27, 0
      %p345 = por %p343, %p344
      %p346 = scmp.ne.s32.totalorder %s335, %s338
      %p347 = scmp.eq.s32.totalorder %s32, 3
      %p348 = por %p346, %p347
      %p349 = scmp.ne.s32.totalorder %s338, %s339
      %p350 = scmp.eq.s32.totalorder %s32, 0
      %p351 = por %p349, %p350
      %p352 = scmp.ne.s32.totalorder %s338, %s339
      %p353 = scmp.eq.s32.totalorder %s33, 3
      %p354 = por %p352, %p353
      %p356 = scmp.ne.s32.totalorder %s339, %s355
      %p357 = scmp.eq.s32.totalorder %s33, 0
      %p358 = por %p356, %p357
      %s359 = ssub.s32 %s35, %s42
      %p360 = scmp.eq.s32.totalorder %s359, 0
      %s362 = sadd.s32 %s361, 1
      %s363 = scalar_select %p360, %s361, %s362
      %p366 = pneg %p360
      %p367 = scmp.eq.s32.totalorder %s27, 3
      %p368 = por %p366, %p367
      %p369 = scmp.ne.s32.totalorder %s361, %s364
      %p370 = scmp.eq.s32.totalorder %s27, 0
      %p371 = por %p369, %p370
      %p372 = scmp.ne.s32.totalorder %s361, %s364
      %p373 = scmp.eq.s32.totalorder %s32, 3
      %p374 = por %p372, %p373
      %p375 = scmp.ne.s32.totalorder %s364, %s365
      %p376 = scmp.eq.s32.totalorder %s32, 0
      %p377 = por %p375, %p376
      %p378 = scmp.ne.s32.totalorder %s364, %s365
      %p379 = scmp.eq.s32.totalorder %s33, 3
      %p380 = por %p378, %p379
      %p382 = scmp.ne.s32.totalorder %s365, %s381
      %p383 = scmp.eq.s32.totalorder %s33, 0
      %p384 = por %p382, %p383
      %s385 = ssub.s32 %s35, %s42
      %p386 = scmp.eq.s32.totalorder %s385, 0
      %s388 = sadd.s32 %s387, 1
      %s389 = scalar_select %p386, %s387, %s388
      %p392 = pneg %p386
      %p393 = scmp.eq.s32.totalorder %s27, 3
      %p394 = por %p392, %p393
      %p395 = scmp.ne.s32.totalorder %s387, %s390
      %p396 = scmp.eq.s32.totalorder %s27, 0
      %p397 = por %p395, %p396
      %p398 = scmp.ne.s32.totalorder %s387, %s390
      %p399 = scmp.eq.s32.totalorder %s32, 3
      %p400 = por %p398, %p399
      %p401 = scmp.ne.s32.totalorder %s390, %s391
      %p402 = scmp.eq.s32.totalorder %s32, 0
      %p403 = por %p401, %p402
      %p404 = scmp.ne.s32.totalorder %s390, %s391
      %p405 = scmp.eq.s32.totalorder %s33, 3
      %p406 = por %p404, %p405
      %p408 = scmp.ne.s32.totalorder %s391, %s407
      %p409 = scmp.eq.s32.totalorder %s33, 0
      %p410 = por %p408, %p409
      %s411 = ssub.s32 %s35, %s42
      %p412 = scmp.eq.s32.totalorder %s411, 0
      %s414 = sadd.s32 %s413, 1
      %s415 = scalar_select %p412, %s413, %s414
      %p418 = pneg %p412
      %p419 = scmp.eq.s32.totalorder %s27, 3
      %p420 = por %p418, %p419
      %p421 = scmp.ne.s32.totalorder %s413, %s416
      %p422 = scmp.eq.s32.totalorder %s27, 0
      %p423 = por %p421, %p422
      %p424 = scmp.ne.s32.totalorder %s413, %s416
      %p425 = scmp.eq.s32.totalorder %s32, 3
      %p426 = por %p424, %p425
      %p427 = scmp.ne.s32.totalorder %s416, %s417
      %p428 = scmp.eq.s32.totalorder %s32, 0
      %p429 = por %p427, %p428
      %p430 = scmp.ne.s32.totalorder %s416, %s417
      %p431 = scmp.eq.s32.totalorder %s33, 3
      %p432 = por %p430, %p431
      %p434 = scmp.ne.s32.totalorder %s417, %s433
      %p435 = scmp.eq.s32.totalorder %s33, 0
      %p436 = por %p434, %p435
      %s437 = ssub.s32 %s35, %s42
      %p438 = scmp.eq.s32.totalorder %s437, 0
      %s440 = sadd.s32 %s439, 1
      %s441 = scalar_select %p438, %s439, %s440
      %p444 = pneg %p438
      %p445 = scmp.eq.s32.totalorder %s27, 3
      %p446 = por %p444, %p445
      %p447 = scmp.ne.s32.totalorder %s439, %s442
      %p448 = scmp.eq.s32.totalorder %s27, 0
      %p449 = por %p447, %p448
      %p450 = scmp.ne.s32.totalorder %s439, %s442
      %p451 = scmp.eq.s32.totalorder %s32, 3
      %p452 = por %p450, %p451
      %p453 = scmp.ne.s32.totalorder %s442, %s443
      %p454 = scmp.eq.s32.totalorder %s32, 0
      %p455 = por %p453, %p454
      %p456 = scmp.ne.s32.totalorder %s442, %s443
      %p457 = scmp.eq.s32.totalorder %s33, 3
      %p458 = por %p456, %p457
      %p460 = scmp.ne.s32.totalorder %s443, %s459
      %p461 = scmp.eq.s32.totalorder %s33, 0
      %p462 = por %p460, %p461
      %s463 = ssub.s32 %s35, %s42
      %p464 = scmp.eq.s32.totalorder %s463, 0
      %s466 = sadd.s32 %s465, 1
      %s467 = scalar_select %p464, %s465, %s466
      %p470 = pneg %p464
      %p471 = scmp.eq.s32.totalorder %s27, 3
      %p472 = por %p470, %p471
      %p473 = scmp.ne.s32.totalorder %s465, %s468
      %p474 = scmp.eq.s32.totalorder %s27, 0
      %p475 = por %p473, %p474
      %p476 = scmp.ne.s32.totalorder %s465, %s468
      %p477 = scmp.eq.s32.totalorder %s32, 3
      %p478 = por %p476, %p477
      %p479 = scmp.ne.s32.totalorder %s468, %s469
      %p480 = scmp.eq.s32.totalorder %s32, 0
      %p481 = por %p479, %p480
      %p482 = scmp.ne.s32.totalorder %s468, %s469
      %p483 = scmp.eq.s32.totalorder %s33, 3
      %p484 = por %p482, %p483
      %p486 = scmp.ne.s32.totalorder %s469, %s485
      %p487 = scmp.eq.s32.totalorder %s33, 0
      %p488 = por %p486, %p487
      %s489 = ssub.s32 %s35, %s42
      %p490 = scmp.eq.s32.totalorder %s489, 0
      %s492 = sadd.s32 %s491, 1
      %s493 = scalar_select %p490, %s491, %s492
      %p496 = pneg %p490
      %p497 = scmp.eq.s32.totalorder %s27, 3
      %p498 = por %p496, %p497
      %p499 = scmp.ne.s32.totalorder %s491, %s494
      %p500 = scmp.eq.s32.totalorder %s27, 0
      %p501 = por %p499, %p500
      %p502 = scmp.ne.s32.totalorder %s491, %s494
      %p503 = scmp.eq.s32.totalorder %s32, 3
      %p504 = por %p502, %p503
      %p505 = scmp.ne.s32.totalorder %s494, %s495
      %p506 = scmp.eq.s32.totalorder %s32, 0
      %p507 = por %p505, %p506
      %p508 = scmp.ne.s32.totalorder %s494, %s495
      %p509 = scmp.eq.s32.totalorder %s33, 3
      %p510 = por %p508, %p509
      %p512 = scmp.ne.s32.totalorder %s495, %s511
      %p513 = scmp.eq.s32.totalorder %s33, 0
      %p514 = por %p512, %p513
      %s515 = ssub.s32 %s34, %s46
      %p516 = scmp.eq.s32.totalorder %s515, 0
      %s518 = sadd.s32 %s517, 1
      %s519 = scalar_select %p516, %s517, %s518
      %p522 = pneg %p516
      %p523 = scmp.eq.s32.totalorder %s27, 3
      %p524 = por %p522, %p523
      %p525 = scmp.ne.s32.totalorder %s517, %s520
      %p526 = scmp.eq.s32.totalorder %s27, 0
      %p527 = por %p525, %p526
      %p528 = scmp.ne.s32.totalorder %s517, %s520
      %p529 = scmp.eq.s32.totalorder %s32, 3
      %p530 = por %p528, %p529
      %p531 = scmp.ne.s32.totalorder %s520, %s521
      %p532 = scmp.eq.s32.totalorder %s32, 0
      %p533 = por %p531, %p532
      %p534 = scmp.ne.s32.totalorder %s520, %s521
      %p535 = scmp.eq.s32.totalorder %s33, 3
      %p536 = por %p534, %p535
      %p538 = scmp.ne.s32.totalorder %s521, %s537
      %p539 = scmp.eq.s32.totalorder %s33, 0
      %p540 = por %p538, %p539
      %p541 = scmp.le.s32.totalorder 1, %s27
      %p542 = scmp.lt.s32.totalorder %s27, 5
      %p543 = pnand %p541, %p542
      %p544 = pneg %p543
      // Predicated region
      $region9: #{sbert_forward.1} parent=5 // pred_check
        _
      $region10: #{sbert_forward.1} parent=5 // pred_check_branch
        %546 = sbr.rel (%p543) target = $region12
      $region11: #{sbert_forward.1} parent=5 // pred_region
        %s547 = ssub.s32 %s27, 1
      $region12: #{sbert_forward.1} parent=5 // pred_fallthru
        _
      %p548 = scmp.lt.s32.totalorder %s27, 4
      // Predicated region
      $region13: #{sbert_forward.1} parent=5 // pred_check
        %p549 = pneg %p548
      $region14: #{sbert_forward.1} parent=5 // pred_check_branch
        %551 = sbr.rel (%p549) target = $region16
      $region15: #{sbert_forward.1} parent=5 // pred_region
        // Predicated region
        $region17: #{sbert_forward.1} parent=15 // pred_check
          %p552 = pneg %p59
        $region18: #{sbert_forward.1} parent=15 // pred_check_branch
          %554 = sbr.rel (%p552) target = $region20
        $region19: #{sbert_forward.1} parent=15 // pred_region
          %p555 = scmp.lt.s32.totalorder %s34, 1
          %s556 = scalar_select %p555, %s34, 1
          %s557 = smul.addr %s556, 8
          %s558 = scalar_lea.vmem %s0, %s557
        $region20: #{sbert_forward.1} parent=15 // pred_fallthru
          _
        // Predicated region
        $region21: #{sbert_forward.1} parent=15 // pred_check
          %p559 = pneg %p85
        $region22: #{sbert_forward.1} parent=15 // pred_check_branch
          %561 = sbr.rel (%p559) target = $region24
        $region23: #{sbert_forward.1} parent=15 // pred_region
          %p562 = scmp.lt.s32.totalorder %s34, 1
          %s563 = scalar_select %p562, %s34, 1
          %s564 = scalar_lea.vmem %s1, %s563
        $region24: #{sbert_forward.1} parent=15 // pred_fallthru
          _
        // Predicated region
        $region25: #{sbert_forward.1} parent=15 // pred_check
          %p565 = pneg %p111
        $region26: #{sbert_forward.1} parent=15 // pred_check_branch
          %567 = sbr.rel (%p565) target = $region28
        $region27: #{sbert_forward.1} parent=15 // pred_region
          %p568 = scmp.lt.s32.totalorder %s35, 1
          %s569 = scalar_select %p568, %s35, 1
          %s570 = smul.addr %s569, 4
          %s571 = smul.addr %s570, 4
          %s572 = scalar_lea.vmem %s2, %s571
        $region28: #{sbert_forward.1} parent=15 // pred_fallthru
          _
        // Predicated region
        $region29: #{sbert_forward.1} parent=15 // pred_check
          %p573 = pneg %p137
        $region30: #{sbert_forward.1} parent=15 // pred_check_branch
          %575 = sbr.rel (%p573) target = $region32
        $region31: #{sbert_forward.1} parent=15 // pred_region
          %p576 = scmp.lt.s32.totalorder %s35, 1
          %s577 = scalar_select %p576, %s35, 1
          %s578 = scalar_lea.vmem %s3, %s577
        $region32: #{sbert_forward.1} parent=15 // pred_fallthru
          _
        // Predicated region
        $region33: #{sbert_forward.1} parent=15 // pred_check
          %p579 = pneg %p163
        $region34: #{sbert_forward.1} parent=15 // pred_check_branch
          %581 = sbr.rel (%p579) target = $region36
        $region35: #{sbert_forward.1} parent=15 // pred_region
          %p582 = scmp.lt.s32.totalorder %s35, 1
          %s583 = scalar_select %p582, %s35, 1
          %s584 = smul.addr %s583, 4
          %s585 = smul.addr %s584, 4
          %s586 = scalar_lea.vmem %s4, %s585
        $region36: #{sbert_forward.1} parent=15 // pred_fallthru
          _
        // Predicated region
        $region37: #{sbert_forward.1} parent=15 // pred_check
          %p587 = pneg %p189
        $region38: #{sbert_forward.1} parent=15 // pred_check_branch
          %589 = sbr.rel (%p587) target = $region40
        $region39: #{sbert_forward.1} parent=15 // pred_region
          %p590 = scmp.lt.s32.totalorder %s35, 1
          %s591 = scalar_select %p590, %s35, 1
          %s592 = scalar_lea.vmem %s5, %s591
        $region40: #{sbert_forward.1} parent=15 // pred_fallthru
          _
        // Predicated region
        $region41: #{sbert_forward.1} parent=15 // pred_check
          %p593 = pneg %p215
        $region42: #{sbert_forward.1} parent=15 // pred_check_branch
          %595 = sbr.rel (%p593) target = $region44
        $region43: #{sbert_forward.1} parent=15 // pred_region
          %p596 = scmp.lt.s32.totalorder %s35, 1
          %s597 = scalar_select %p596, %s35, 1
          %s598 = smul.addr %s597, 4
          %s599 = smul.addr %s598, 4
          %s600 = scalar_lea.vmem %s6, %s599
        $region44: #{sbert_forward.1} parent=15 // pred_fallthru
          _
        // Predicated region
        $region45: #{sbert_forward.1} parent=15 // pred_check
          %p601 = pneg %p241
        $region46: #{sbert_forward.1} parent=15 // pred_check_branch
          %603 = sbr.rel (%p601) target = $region48
        $region47: #{sbert_forward.1} parent=15 // pred_region
          %p604 = scmp.lt.s32.totalorder %s35, 1
          %s605 = scalar_select %p604, %s35, 1
          %s606 = scalar_lea.vmem %s7, %s605
        $region48: #{sbert_forward.1} parent=15 // pred_fallthru
          _
        // Predicated region
        $region49: #{sbert_forward.1} parent=15 // pred_check
          %p607 = pneg %p267
        $region50: #{sbert_forward.1} parent=15 // pred_check_branch
          %609 = sbr.rel (%p607) target = $region52
        $region51: #{sbert_forward.1} parent=15 // pred_region
          %p610 = scmp.lt.s32.totalorder %s35, 1
          %s611 = scalar_select %p610, %s35, 1
          %s612 = smul.addr %s611, 4
          %s613 = smul.addr %s612, 4
          %s614 = scalar_lea.vmem %s8, %s613
        $region52: #{sbert_forward.1} parent=15 // pred_fallthru
          _
        // Predicated region
        $region53: #{sbert_forward.1} parent=15 // pred_check
          %p615 = pneg %p293
        $region54: #{sbert_forward.1} parent=15 // pred_check_branch
          %617 = sbr.rel (%p615) target = $region56
        $region55: #{sbert_forward.1} parent=15 // pred_region
          %p618 = scmp.lt.s32.totalorder %s35, 1
          %s619 = scalar_select %p618, %s35, 1
          %s620 = scalar_lea.vmem %s9, %s619
        $region56: #{sbert_forward.1} parent=15 // pred_fallthru
          _
        // Predicated region
        $region57: #{sbert_forward.1} parent=15 // pred_check
          %p621 = pneg %p319
        $region58: #{sbert_forward.1} parent=15 // pred_check_branch
          %623 = sbr.rel (%p621) target = $region60
        $region59: #{sbert_forward.1} parent=15 // pred_region
          %p624 = scmp.lt.s32.totalorder %s35, 1
          %s625 = scalar_select %p624, %s35, 1
          %s626 = scalar_lea.vmem %s10, %s625
        $region60: #{sbert_forward.1} parent=15 // pred_fallthru
          _
        // Predicated region
        $region61: #{sbert_forward.1} parent=15 // pred_check
          %p627 = pneg %p345
        $region62: #{sbert_forward.1} parent=15 // pred_check_branch
          %629 = sbr.rel (%p627) target = $region64
        $region63: #{sbert_forward.1} parent=15 // pred_region
          %p630 = scmp.lt.s32.totalorder %s35, 1
          %s631 = scalar_select %p630, %s35, 1
          %s632 = scalar_lea.vmem %s11, %s631
        $region64: #{sbert_forward.1} parent=15 // pred_fallthru
          _
        // Predicated region
        $region65: #{sbert_forward.1} parent=15 // pred_check
          %p633 = pneg %p371
        $region66: #{sbert_forward.1} parent=15 // pred_check_branch
          %635 = sbr.rel (%p633) target = $region68
        $region67: #{sbert_forward.1} parent=15 // pred_region
          %p636 = scmp.lt.s32.totalorder %s35, 1
          %s637 = scalar_select %p636, %s35, 1
          %s638 = smul.addr %s637, 4
          %s639 = smul.addr %s638, 4
          %s640 = scalar_lea.vmem %s12, %s639
        $region68: #{sbert_forward.1} parent=15 // pred_fallthru
          _
        // Predicated region
        $region69: #{sbert_forward.1} parent=15 // pred_check
          %p641 = pneg %p397
        $region70: #{sbert_forward.1} parent=15 // pred_check_branch
          %643 = sbr.rel (%p641) target = $region72
        $region71: #{sbert_forward.1} parent=15 // pred_region
          %p644 = scmp.lt.s32.totalorder %s35, 1
          %s645 = scalar_select %p644, %s35, 1
          %s646 = scalar_lea.vmem %s13, %s645
        $region72: #{sbert_forward.1} parent=15 // pred_fallthru
          _
        // Predicated region
        $region73: #{sbert_forward.1} parent=15 // pred_check
          %p647 = pneg %p423
        $region74: #{sbert_forward.1} parent=15 // pred_check_branch
          %649 = sbr.rel (%p647) target = $region76
        $region75: #{sbert_forward.1} parent=15 // pred_region
          %p650 = scmp.lt.s32.totalorder %s35, 1
          %s651 = scalar_select %p650, %s35, 1
          %s652 = smul.addr %s651, 8
          %s653 = smul.addr %s652, 4
          %s654 = scalar_lea.vmem %s14, %s653
        $region76: #{sbert_forward.1} parent=15 // pred_fallthru
          _
        // Predicated region
        $region77: #{sbert_forward.1} parent=15 // pred_check
          %p655 = pneg %p449
        $region78: #{sbert_forward.1} parent=15 // pred_check_branch
          %657 = sbr.rel (%p655) target = $region80
        $region79: #{sbert_forward.1} parent=15 // pred_region
          %p658 = scmp.lt.s32.totalorder %s35, 1
          %s659 = scalar_select %p658, %s35, 1
          %s660 = scalar_lea.vmem %s15, %s659
        $region80: #{sbert_forward.1} parent=15 // pred_fallthru
          _
        // Predicated region
        $region81: #{sbert_forward.1} parent=15 // pred_check
          %p661 = pneg %p475
        $region82: #{sbert_forward.1} parent=15 // pred_check_branch
          %663 = sbr.rel (%p661) target = $region84
        $region83: #{sbert_forward.1} parent=15 // pred_region
          %p664 = scmp.lt.s32.totalorder %s35, 1
          %s665 = scalar_select %p664, %s35, 1
          %s666 = scalar_lea.vmem %s16, %s665
        $region84: #{sbert_forward.1} parent=15 // pred_fallthru
          _
        // Predicated region
        $region85: #{sbert_forward.1} parent=15 // pred_check
          %p667 = pneg %p501
        $region86: #{sbert_forward.1} parent=15 // pred_check_branch
          %669 = sbr.rel (%p667) target = $region88
        $region87: #{sbert_forward.1} parent=15 // pred_region
          %p670 = scmp.lt.s32.totalorder %s35, 1
          %s671 = scalar_select %p670, %s35, 1
          %s672 = scalar_lea.vmem %s17, %s671
        $region88: #{sbert_forward.1} parent=15 // pred_fallthru
          _
      $region16: #{sbert_forward.1} parent=5 // pred_fallthru
        _
      %p673 = scmp.le.s32.totalorder 1, %s27
      %p674 = scmp.lt.s32.totalorder %s27, 5
      %p675 = pnand %p673, %p674
      %p676 = pneg %p675
      // Predicated region
      $region89: #{sbert_forward.1} parent=5 // pred_check
        _
      $region90: #{sbert_forward.1} parent=5 // pred_check_branch
        %678 = sbr.rel (%p675) target = $region92
      $region91: #{sbert_forward.1} parent=5 // pred_region
        %s679 = ssub.s32 %s27, 1
        %p680 = scmp.lt.s32.totalorder %s36, 1
        %s681 = scalar_select %p680, %s36, 1
        %s682 = smul.addr %s681, 8
        %s683 = scalar_lea.vmem %s0, %s682
        %p684 = pneg %p65
        %p685 = pneg %p62
        %p686 = scmp.lt.s32.totalorder %s36, 1
        %s687 = scalar_select %p686, %s36, 1
        %s688 = scalar_lea.vmem %s1, %s687
        %p689 = pneg %p91
        %p690 = pneg %p88
        %p691 = scmp.lt.s32.totalorder %s37, 1
        %s692 = scalar_select %p691, %s37, 1
        %s693 = smul.addr %s692, 4
        %s694 = smul.addr %s693, 4
        %s695 = scalar_lea.vmem %s2, %s694
        %p696 = pneg %p117
        %p697 = pneg %p114
        %p698 = scmp.lt.s32.totalorder %s37, 1
        %s699 = scalar_select %p698, %s37, 1
        %s700 = scalar_lea.vmem %s3, %s699
        %p701 = pneg %p143
        %p702 = pneg %p140
        %p703 = scmp.lt.s32.totalorder %s37, 1
        %s704 = scalar_select %p703, %s37, 1
        %s705 = smul.addr %s704, 4
        %s706 = smul.addr %s705, 4
        %s707 = scalar_lea.vmem %s4, %s706
        %p708 = pneg %p169
        %p709 = pneg %p166
        %p710 = scmp.lt.s32.totalorder %s37, 1
        %s711 = scalar_select %p710, %s37, 1
        %s712 = scalar_lea.vmem %s5, %s711
        %p713 = pneg %p195
        %p714 = pneg %p192
        %p715 = scmp.lt.s32.totalorder %s37, 1
        %s716 = scalar_select %p715, %s37, 1
        %s717 = smul.addr %s716, 4
        %s718 = smul.addr %s717, 4
        %s719 = scalar_lea.vmem %s6, %s718
        %p720 = pneg %p221
        %p721 = pneg %p218
        %p722 = scmp.lt.s32.totalorder %s37, 1
        %s723 = scalar_select %p722, %s37, 1
        %s724 = scalar_lea.vmem %s7, %s723
        %p725 = pneg %p247
        %p726 = pneg %p244
        %p727 = scmp.lt.s32.totalorder %s37, 1
        %s728 = scalar_select %p727, %s37, 1
        %s729 = smul.addr %s728, 4
        %s730 = smul.addr %s729, 4
        %s731 = scalar_lea.vmem %s8, %s730
        %p732 = pneg %p273
        %p733 = pneg %p270
        %p734 = scmp.lt.s32.totalorder %s37, 1
        %s735 = scalar_select %p734, %s37, 1
        %s736 = scalar_lea.vmem %s9, %s735
        %p737 = pneg %p299
        %p738 = pneg %p296
        %p739 = scmp.lt.s32.totalorder %s37, 1
        %s740 = scalar_select %p739, %s37, 1
        %s741 = scalar_lea.vmem %s10, %s740
        %p742 = pneg %p325
        %p743 = pneg %p322
        %p744 = scmp.lt.s32.totalorder %s37, 1
        %s745 = scalar_select %p744, %s37, 1
        %s746 = scalar_lea.vmem %s11, %s745
        %p747 = pneg %p351
        %p748 = pneg %p348
        %p749 = scmp.lt.s32.totalorder %s37, 1
        %s750 = scalar_select %p749, %s37, 1
        %s751 = smul.addr %s750, 4
        %s752 = smul.addr %s751, 4
        %s753 = scalar_lea.vmem %s12, %s752
        %p754 = pneg %p377
        %p755 = pneg %p374
        %p756 = scmp.lt.s32.totalorder %s37, 1
        %s757 = scalar_select %p756, %s37, 1
        %s758 = scalar_lea.vmem %s13, %s757
        %p759 = pneg %p403
        %p760 = pneg %p400
        %p761 = scmp.lt.s32.totalorder %s37, 1
        %s762 = scalar_select %p761, %s37, 1
        %s763 = smul.addr %s762, 8
        %s764 = smul.addr %s763, 4
        %s765 = scalar_lea.vmem %s14, %s764
        %p766 = pneg %p429
        %p767 = pneg %p426
        %p768 = scmp.lt.s32.totalorder %s37, 1
        %s769 = scalar_select %p768, %s37, 1
        %s770 = scalar_lea.vmem %s15, %s769
        %p771 = pneg %p455
        %p772 = pneg %p452
        %p773 = scmp.lt.s32.totalorder %s37, 1
        %s774 = scalar_select %p773, %s37, 1
        %s775 = scalar_lea.vmem %s16, %s774
        %p776 = pneg %p481
        %p777 = pneg %p478
        %p778 = scmp.lt.s32.totalorder %s37, 1
        %s779 = scalar_select %p778, %s37, 1
        %s780 = scalar_lea.vmem %s17, %s779
        %p781 = pneg %p507
        %p782 = pneg %p504
        %p783 = pneg %p533
        %p784 = pneg %p530
        %s785 = sand.u32 %s520, 1
        %s786 = scalar_lea.sflag [#allocation5], %s785
        %s787 = sand.u32 %s520, 1
        %s788 = scalar_lea.vmem [#allocation4], %s787
        %p789 = scmp.lt.s32.totalorder %s36, 1
        %s790 = scalar_select %p789, %s36, 1
        %s791 = smul.addr %s790, 8
        %s792 = scalar_lea.vmem %s0, %s791
        %p793 = scmp.lt.s32.totalorder %s36, 1
        %s794 = scalar_select %p793, %s36, 1
        %s795 = scalar_lea.vmem %s1, %s794
        %p796 = scmp.lt.s32.totalorder %s37, 1
        %s797 = scalar_select %p796, %s37, 1
        %s798 = smul.addr %s797, 4
        %s799 = smul.addr %s798, 4
        %s800 = scalar_lea.vmem %s2, %s799
        %p801 = scmp.lt.s32.totalorder %s37, 1
        %s802 = scalar_select %p801, %s37, 1
        %s803 = scalar_lea.vmem %s3, %s802
        %p804 = scmp.lt.s32.totalorder %s37, 1
        %s805 = scalar_select %p804, %s37, 1
        %s806 = smul.addr %s805, 4
        %s807 = smul.addr %s806, 4
        %s808 = scalar_lea.vmem %s4, %s807
        %p809 = scmp.lt.s32.totalorder %s37, 1
        %s810 = scalar_select %p809, %s37, 1
        %s811 = scalar_lea.vmem %s5, %s810
        %p812 = scmp.lt.s32.totalorder %s37, 1
        %s813 = scalar_select %p812, %s37, 1
        %s814 = smul.addr %s813, 4
        %s815 = smul.addr %s814, 4
        %s816 = scalar_lea.vmem %s6, %s815
        %p817 = scmp.lt.s32.totalorder %s37, 1
        %s818 = scalar_select %p817, %s37, 1
        %s819 = scalar_lea.vmem %s7, %s818
        %p820 = scmp.lt.s32.totalorder %s37, 1
        %s821 = scalar_select %p820, %s37, 1
        %s822 = smul.addr %s821, 4
        %s823 = smul.addr %s822, 4
        %s824 = scalar_lea.vmem %s8, %s823
        %p825 = scmp.lt.s32.totalorder %s37, 1
        %s826 = scalar_select %p825, %s37, 1
        %s827 = scalar_lea.vmem %s9, %s826
        %p828 = scmp.lt.s32.totalorder %s37, 1
        %s829 = scalar_select %p828, %s37, 1
        %s830 = scalar_lea.vmem %s10, %s829
        %p831 = scmp.lt.s32.totalorder %s37, 1
        %s832 = scalar_select %p831, %s37, 1
        %s833 = scalar_lea.vmem %s11, %s832
        %p834 = scmp.lt.s32.totalorder %s37, 1
        %s835 = scalar_select %p834, %s37, 1
        %s836 = smul.addr %s835, 4
        %s837 = smul.addr %s836, 4
        %s838 = scalar_lea.vmem %s12, %s837
        %p839 = scmp.lt.s32.totalorder %s37, 1
        %s840 = scalar_select %p839, %s37, 1
        %s841 = scalar_lea.vmem %s13, %s840
        %p842 = scmp.lt.s32.totalorder %s37, 1
        %s843 = scalar_select %p842, %s37, 1
        %s844 = smul.addr %s843, 8
        %s845 = smul.addr %s844, 4
        %s846 = scalar_lea.vmem %s14, %s845
        %p847 = scmp.lt.s32.totalorder %s37, 1
        %s848 = scalar_select %p847, %s37, 1
        %s849 = scalar_lea.vmem %s15, %s848
        %p850 = scmp.lt.s32.totalorder %s37, 1
        %s851 = scalar_select %p850, %s37, 1
        %s852 = scalar_lea.vmem %s16, %s851
        %p853 = scmp.lt.s32.totalorder %s37, 1
        %s854 = scalar_select %p853, %s37, 1
        %s855 = scalar_lea.vmem %s17, %s854
        %p857 = scmp.eq.s32.totalorder %s37, 0
        // Predicated region
        $region93: #{sbert_forward.1} parent=91 // pred_check
          %p858 = pneg %p857
        $region94: #{sbert_forward.1} parent=91 // pred_check_branch
          %860 = sbr.rel (%p858) target = $region96
        $region95: #{sbert_forward.1} parent=91 // pred_region
          %v861 = vld [vmem:[%s792] sm:$0xff]
          %vm862 = vcmask 261120
          %863 = vst.msk [vmem:[#allocation2] sm:$0xff] %vm862, %v861
        $region96: #{sbert_forward.1} parent=91 // pred_fallthru
          _
        %v864 = vld [vmem:[#allocation2] sm:$0xff]
        %v865 = vld [vmem:[%s795] sm:$0x1]
        %v866 = vpack.c.bf16 %v864, %v864
        %v867 = vld [vmem:[%s800] sm:$0xf]
        %v868 = vld [vmem:[%s800 + $0x4] sm:$0xf]
        %v869 = vld [vmem:[%s800 + $0x8] sm:$0xf]
        %v870 = vld [vmem:[%s800 + $0xc] sm:$0xf]
        %v871 = vld [vmem:[%s803] sm:$0x1]
        %v873 = vperm.slane %v871, 0
        %v879 = vunpack.c.l.b16 %v867
        %v880 = vunpack.c.l.b16 %v868
        %v881 = vunpack.c.l.b16 %v869
        %v882 = vunpack.c.l.b16 %v870
        %v883 = vpack.c.b16 %v880, %v879
        %v884 = vpack.c.b16 %v882, %v881
        %vm887 = vcmask 261120
        %v889 = vsel %vm887, %v866, 0
        %891 = vmatpush.bf16.msra.mxu0 0
        %892 = vmatpush.bf16.msra.mxu0 0
        %893 = vmatpush.bf16.msra.mxu0 0
        %894 = vmatpush.bf16.msra.mxu0 0
        %895 = vmatpush.bf16.msra.mxu0 0
        %896 = vmatpush.bf16.msra.mxu0 0
        %897 = vmatpush.bf16.msra.mxu0 %v884
        %898 = vmatpush.bf16.msra.mxu0 %v883
        %899 = vmatmul.bf16.gmra.mxu0 %v889
        %v900 = vpop.f32.mrf.mxu0
        %v901 = vadd.f32 %v873, %v900
        %v902 = vpop.f32.mrf.mxu0
        %903 = vdwg.mxu0
        %v904 = vld [vmem:[%s808] sm:$0xf]
        %v905 = vld [vmem:[%s808 + $0x4] sm:$0xf]
        %v906 = vld [vmem:[%s808 + $0x8] sm:$0xf]
        %v907 = vld [vmem:[%s808 + $0xc] sm:$0xf]
        %v908 = vld [vmem:[%s811] sm:$0x1]
        %v910 = vperm.slane %v908, 0
        %v916 = vunpack.c.l.b16 %v904
        %v917 = vunpack.c.l.b16 %v905
        %v918 = vunpack.c.l.b16 %v906
        %v919 = vunpack.c.l.b16 %v907
        %v920 = vpack.c.b16 %v917, %v916
        %v921 = vpack.c.b16 %v919, %v918
        %924 = vmatpush.bf16.msra.mxu0 0
        %925 = vmatpush.bf16.msra.mxu0 0
        %926 = vmatpush.bf16.msra.mxu0 0
        %927 = vmatpush.bf16.msra.mxu0 0
        %928 = vmatpush.bf16.msra.mxu0 0
        %929 = vmatpush.bf16.msra.mxu0 0
        %930 = vmatpush.bf16.msra.mxu0 %v921
        %931 = vmatpush.bf16.msra.mxu0 %v920
        %932 = vmatmul.bf16.gmra.mxu0 %v889
        %v933 = vpop.f32.mrf.mxu0
        %v934 = vadd.f32 %v910, %v933
        %v935 = vpop.f32.mrf.mxu0
        %936 = vdwg.mxu0
        %v937 = vld [vmem:[%s816] sm:$0xf]
        %v938 = vld [vmem:[%s816 + $0x4] sm:$0xf]
        %v939 = vld [vmem:[%s816 + $0x8] sm:$0xf]
        %v940 = vld [vmem:[%s816 + $0xc] sm:$0xf]
        %v941 = vld [vmem:[%s819] sm:$0x1]
        %v943 = vperm.slane %v941, 0
        %v949 = vunpack.c.l.b16 %v937
        %v950 = vunpack.c.l.b16 %v938
        %v951 = vunpack.c.l.b16 %v939
        %v952 = vunpack.c.l.b16 %v940
        %v953 = vpack.c.b16 %v950, %v949
        %v954 = vpack.c.b16 %v952, %v951
        %957 = vmatpush.bf16.msra.mxu0 0
        %958 = vmatpush.bf16.msra.mxu0 0
        %959 = vmatpush.bf16.msra.mxu0 0
        %960 = vmatpush.bf16.msra.mxu0 0
        %961 = vmatpush.bf16.msra.mxu0 0
        %962 = vmatpush.bf16.msra.mxu0 0
        %963 = vmatpush.bf16.msra.mxu0 %v954
        %964 = vmatpush.bf16.msra.mxu0 %v953
        %965 = vmatmul.bf16.gmra.mxu0 %v889
        %v966 = vpop.f32.mrf.mxu0
        %v967 = vadd.f32 %v943, %v966
        %v968 = vpop.f32.mrf.mxu0
        %969 = vdwg.mxu0
        %v970 = vpack.c.bf16 %v901, %v901
        %v971 = vpack.c.bf16 %v934, %v934
        %v972 = vpack.c.bf16 %v967, %v967
        %v974 = vperm.slane %v865, 0
        %vm976 = vcmask 130048
        %v978 = vsel %vm976, %v970, 0
        %v981 = vsel %vm976, %v971, 0
        %983 = vmatpush.bf16.xpose.msra.mxu0 0
        %984 = vmatpush.bf16.xpose.msra.mxu0 0
        %985 = vmatpush.bf16.xpose.msra.mxu0 0
        %986 = vmatpush.bf16.xpose.msra.mxu0 0
        %987 = vmatpush.bf16.xpose.msra.mxu0 0
        %988 = vmatpush.bf16.xpose.msra.mxu0 0
        %989 = vmatpush.bf16.xpose.msra.mxu0 0
        %990 = vmatpush.bf16.xpose.msra.mxu0 %v981
        %991 = vmatmul.bf16.gmra.mxu0 %v978
        %v992 = vpop.f32.mrf.mxu0
        %v993 = vadd.f32 0.0, %v992
        %v994 = vpop.f32.mrf.mxu0
        %995 = vdwg.mxu0
        %v996 = vmul.f32 %v993, 0.25
        %v997 = vadd.f32 %v996, %v974
        %vm998 = vcmask 64512
        %v999 = vsel %vm998, %v997, -inf
        %1000 = vmax.xlane.f32.xlu0 %v999
        %v1001 = vpop.xlane.xlu0 %1000
        %v1002 = vsub.f32 %v997, %v1001
        %v1003 = vmul.f32 %v1002, 1.442695
        %v1004 = vpow.pop %v1003
        %v1005 = vsel %vm998, %v1004, 0.0
        %1006 = vadd.xlane.f32.xlu0 %v1005
        %v1007 = vpop.xlane.xlu0 %1006
        %v1008 = vrcp.pop %v1007
        %v1009 = vmul.f32 %v1004, %v1008
        %v1010 = vpack.c.bf16 %v1009, %v1009
        %v1012 = vsel %vm998, %v1010, 0
        %vm1014 = vcmask 1043456
        %v1016 = vsel %vm1014, %v972, 0
        %1018 = vmatpush.bf16.msra.mxu0 0
        %1019 = vmatpush.bf16.msra.mxu0 0
        %1020 = vmatpush.bf16.msra.mxu0 0
        %1021 = vmatpush.bf16.msra.mxu0 0
        %1022 = vmatpush.bf16.msra.mxu0 0
        %1023 = vmatpush.bf16.msra.mxu0 0
        %1024 = vmatpush.bf16.msra.mxu0 0
        %1025 = vmatpush.bf16.msra.mxu0 %v1016
        %1026 = vmatmul.bf16.gmra.mxu0 %v1012
        %v1027 = vpop.f32.mrf.mxu0
        %v1028 = vadd.f32 0.0, %v1027
        %v1029 = vpop.f32.mrf.mxu0
        %1030 = vdwg.mxu0
        %1031 = vst.msk [vmem:[#allocation3] sm:$0xff] %vm976, %v1028
        %v1033 = vunpack.c.l.b16 %v970
        %v1034 = vpack.c.b16 %v1033, %v1033
        %1035 = vrot.lane.b32.xlu0 %v1034, 112
        %v1036 = vpop.permute.xlu0 %1035
        %v1038 = vunpack.c.l.b16 %v971
        %v1039 = vpack.c.b16 %v1038, %v1038
        %1040 = vrot.lane.b32.xlu0 %v1039, 112
        %v1041 = vpop.permute.xlu0 %1040
        %v1043 = vsel %vm976, %v1036, 0
        %v1046 = vsel %vm976, %v1041, 0
        %1048 = vmatpush.bf16.xpose.msra.mxu0 0
        %1049 = vmatpush.bf16.xpose.msra.mxu0 0
        %1050 = vmatpush.bf16.xpose.msra.mxu0 0
        %1051 = vmatpush.bf16.xpose.msra.mxu0 0
        %1052 = vmatpush.bf16.xpose.msra.mxu0 0
        %1053 = vmatpush.bf16.xpose.msra.mxu0 0
        %1054 = vmatpush.bf16.xpose.msra.mxu0 0
        %1055 = vmatpush.bf16.xpose.msra.mxu0 %v1046
        %1056 = vmatmul.bf16.gmra.mxu0 %v1043
        %v1057 = vpop.f32.mrf.mxu0
        %v1058 = vadd.f32 0.0, %v1057
        %v1059 = vpop.f32.mrf.mxu0
        %1060 = vdwg.mxu0
        %v1061 = vmul.f32 %v1058, 0.25
        %v1062 = vadd.f32 %v1061, %v974
        %v1063 = vsel %vm998, %v1062, -inf
        %1064 = vmax.xlane.f32.xlu0 %v1063
        %v1065 = vpop.xlane.xlu0 %1064
        %v1066 = vsub.f32 %v1062, %v1065
        %v1067 = vmul.f32 %v1066, 1.442695
        %v1068 = vpow.pop %v1067
        %v1069 = vsel %vm998, %v1068, 0.0
        %1070 = vadd.xlane.f32.xlu0 %v1069
        %v1071 = vpop.xlane.xlu0 %1070
        %v1072 = vrcp.pop %v1071
        %v1073 = vmul.f32 %v1068, %v1072
        %v1074 = vpack.c.bf16 %v1073, %v1073
        %v1076 = vunpack.c.l.b16 %v972
        %v1077 = vpack.c.b16 %v1076, %v1076
        %1078 = vrot.lane.b32.xlu0 %v1077, 112
        %v1079 = vpop.permute.xlu0 %1078
        %v1081 = vsel %vm998, %v1074, 0
        %v1084 = vsel %vm1014, %v1079, 0
        %1086 = vmatpush.bf16.msra.mxu0 0
        %1087 = vmatpush.bf16.msra.mxu0 0
        %1088 = vmatpush.bf16.msra.mxu0 0
        %1089 = vmatpush.bf16.msra.mxu0 0
        %1090 = vmatpush.bf16.msra.mxu0 0
        %1091 = vmatpush.bf16.msra.mxu0 0
        %1092 = vmatpush.bf16.msra.mxu0 0
        %1093 = vmatpush.bf16.msra.mxu0 %v1084
        %1094 = vmatmul.bf16.gmra.mxu0 %v1081
        %v1095 = vpop.f32.mrf.mxu0
        %v1096 = vadd.f32 0.0, %v1095
        %v1097 = vpop.f32.mrf.mxu0
        %1098 = vdwg.mxu0
        %1100 = vrot.lane.b32.xlu0 %v1096, 16
        %v1101 = vpop.permute.xlu0 %1100
        %vm1103 = vcmask 261248
        %1104 = vst.msk [vmem:[#allocation3] sm:$0xff] %vm1103, %v1101
        %v1105 = vld [vmem:[#allocation3] sm:$0xff]
        %v1106 = vpack.c.bf16 %v1105, %v1105
        %v1107 = vld [vmem:[%s824] sm:$0xf]
        %v1108 = vld [vmem:[%s824 + $0x4] sm:$0xf]
        %v1109 = vld [vmem:[%s824 + $0x8] sm:$0xf]
        %v1110 = vld [vmem:[%s824 + $0xc] sm:$0xf]
        %v1111 = vld [vmem:[%s827] sm:$0x1]
        %v1113 = vperm.slane %v1111, 0
        %v1119 = vunpack.c.l.b16 %v1107
        %v1120 = vunpack.c.l.b16 %v1108
        %v1121 = vunpack.c.l.b16 %v1109
        %v1122 = vunpack.c.l.b16 %v1110
        %v1123 = vpack.c.b16 %v1120, %v1119
        %v1124 = vpack.c.b16 %v1122, %v1121
        %v1128 = vsel %vm887, %v1106, 0
        %1130 = vmatpush.bf16.msra.mxu0 0
        %1131 = vmatpush.bf16.msra.mxu0 0
        %1132 = vmatpush.bf16.msra.mxu0 0
        %1133 = vmatpush.bf16.msra.mxu0 0
        %1134 = vmatpush.bf16.msra.mxu0 0
        %1135 = vmatpush.bf16.msra.mxu0 0
        %1136 = vmatpush.bf16.msra.mxu0 %v1124
        %1137 = vmatpush.bf16.msra.mxu0 %v1123
        %1138 = vmatmul.bf16.gmra.mxu0 %v1128
        %v1139 = vpop.f32.mrf.mxu0
        %v1140 = vadd.f32 %v1113, %v1139
        %v1141 = vpop.f32.mrf.mxu0
        %1142 = vdwg.mxu0
        %v1143 = vadd.f32 %v864, %v1140
        %v1144 = vld [vmem:[%s830] sm:$0x1]
        %v1145 = vld [vmem:[%s833] sm:$0x1]
        %v1146 = vsel %vm887, %v1143, 0.0
        %1147 = vadd.xlane.f32.xlu0 %v1146
        %v1148 = vpop.xlane.xlu0 %1147
        %v1149 = vrcp.pop 32.0
        %v1150 = vmul.f32 32.0, %v1149
        %v1151 = vsub.f32 1.0, %v1150
        %v1152 = vmul.f32 %v1149, %v1151
        %v1153 = vadd.f32 %v1149, %v1152
        %vm1154 = vweird.f32 %v1149
        %v1155 = vsel %vm1154, %v1149, %v1153
        %v1156 = vmul.f32 %v1148, %v1155
        %v1157 = vsub.f32 %v1143, %v1156
        %v1158 = vmul.f32 %v1157, %v1157
        %v1159 = vsel %vm887, %v1158, 0.0
        %1160 = vadd.xlane.f32.xlu0 %v1159
        %v1161 = vpop.xlane.xlu0 %1160
        %v1162 = vmul.f32 %v1161, %v1155
        %v1163 = vadd.f32 %v1162, 1e-12
        %v1164 = vrsqrt.pop %v1163
        %v1165 = vmul.f32 %v1164, %v1163
        %v1166 = vmul.f32 %v1165, %v1164
        %v1167 = vmul.f32 0.5, %v1166
        %v1168 = vsub.f32 1.5, %v1167
        %v1169 = vmul.f32 %v1164, %v1168
        %vm1170 = vweird.f32 %v1163
        %vm1171 = vweird.f32 %v1164
        %vm1172 = vmor %vm1170, %vm1171
        %v1173 = vsel %vm1172, %v1164, %v1169
        %v1174 = vmul.f32 %v1157, %v1173
        %v1176 = vperm.slane %v1144, 0
        %v1178 = vmul.f32 %v1174, %v1176
        %v1180 = vperm.slane %v1145, 0
        %v1182 = vadd.f32 %v1178, %v1180
        %v1183 = vpack.c.bf16 %v1182, %v1182
        %v1184 = vld [vmem:[%s838] sm:$0xf]
        %v1185 = vld [vmem:[%s838 + $0x4] sm:$0xf]
        %v1186 = vld [vmem:[%s838 + $0x8] sm:$0xf]
        %v1187 = vld [vmem:[%s838 + $0xc] sm:$0xf]
        %v1188 = vld [vmem:[%s841] sm:$0x1]
        %v1190 = vperm.slane %v1188, 0
        %v1196 = vunpack.c.l.b16 %v1184
        %v1197 = vunpack.c.l.b16 %v1185
        %v1198 = vunpack.c.l.b16 %v1186
        %v1199 = vunpack.c.l.b16 %v1187
        %v1200 = vpack.c.b16 %v1197, %v1196
        %v1201 = vpack.c.b16 %v1199, %v1198
        %v1205 = vsel %vm887, %v1183, 0
        %1207 = vmatpush.bf16.msra.mxu0 0
        %1208 = vmatpush.bf16.msra.mxu0 0
        %1209 = vmatpush.bf16.msra.mxu0 0
        %1210 = vmatpush.bf16.msra.mxu0 0
        %1211 = vmatpush.bf16.msra.mxu0 0
        %1212 = vmatpush.bf16.msra.mxu0 0
        %1213 = vmatpush.bf16.msra.mxu0 %v1201
        %1214 = vmatpush.bf16.msra.mxu0 %v1200
        %1215 = vmatmul.bf16.gmra.mxu0 %v1205
        %v1216 = vpop.f32.mrf.mxu0
        %v1217 = vadd.f32 %v1190, %v1216
        %v1218 = vpop.f32.mrf.mxu0
        %1219 = vdwg.mxu0
        %v1220 = vmul.f32 %v1217, %v1217
        %v1221 = vmul.f32 %v1217, %v1220
        %v1222 = vmul.f32 %v1221, 0.044715
        %v1223 = vadd.f32 %v1217, %v1222
        %v1224 = vmul.f32 %v1223, 0.7978846
        %v1225 = vtanh.pop %v1224
        %v1226 = vadd.f32 %v1225, 1.0
        %v1227 = vmul.f32 %v1226, 0.5
        %v1228 = vmul.f32 %v1217, %v1227
        %v1229 = vpack.c.bf16 %v1228, %v1228
        %v1230 = vld [vmem:[%s846] sm:$0xf]
        %v1231 = vld [vmem:[%s846 + $0x4] sm:$0xf]
        %v1232 = vld [vmem:[%s846 + $0x8] sm:$0xf]
        %v1233 = vld [vmem:[%s846 + $0xc] sm:$0xf]
        %v1234 = vld [vmem:[%s846 + $0x10] sm:$0xf]
        %v1235 = vld [vmem:[%s846 + $0x14] sm:$0xf]
        %v1236 = vld [vmem:[%s846 + $0x18] sm:$0xf]
        %v1237 = vld [vmem:[%s846 + $0x1c] sm:$0xf]
        %v1238 = vld [vmem:[%s849] sm:$0x1]
        %v1240 = vperm.slane %v1238, 0
        %v1250 = vunpack.c.l.b16 %v1230
        %v1251 = vunpack.c.l.b16 %v1231
        %v1252 = vunpack.c.l.b16 %v1232
        %v1253 = vunpack.c.l.b16 %v1233
        %v1254 = vunpack.c.l.b16 %v1234
        %v1255 = vunpack.c.l.b16 %v1235
        %v1256 = vunpack.c.l.b16 %v1236
        %v1257 = vunpack.c.l.b16 %v1237
        %v1258 = vpack.c.b16 %v1251, %v1250
        %v1259 = vpack.c.b16 %v1253, %v1252
        %v1260 = vpack.c.b16 %v1255, %v1254
        %v1261 = vpack.c.b16 %v1257, %v1256
        %vm1266 = vcmask 523264
        %v1268 = vsel %vm1266, %v1229, 0
        %1270 = vmatpush.bf16.msra.mxu0 0
        %1271 = vmatpush.bf16.msra.mxu0 0
        %1272 = vmatpush.bf16.msra.mxu0 0
        %1273 = vmatpush.bf16.msra.mxu0 0
        %1274 = vmatpush.bf16.msra.mxu0 %v1261
        %1275 = vmatpush.bf16.msra.mxu0 %v1260
        %1276 = vmatpush.bf16.msra.mxu0 %v1259
        %1277 = vmatpush.bf16.msra.mxu0 %v1258
        %1278 = vmatmul.bf16.gmra.mxu0 %v1268
        %v1279 = vpop.f32.mrf.mxu0
        %v1280 = vadd.f32 %v1240, %v1279
        %v1281 = vpop.f32.mrf.mxu0
        %1282 = vdwg.mxu0
        %v1283 = vadd.f32 %v1182, %v1280
        %v1284 = vld [vmem:[%s852] sm:$0x1]
        %v1285 = vld [vmem:[%s855] sm:$0x1]
        %v1286 = vsel %vm887, %v1283, 0.0
        %1287 = vadd.xlane.f32.xlu0 %v1286
        %v1288 = vpop.xlane.xlu0 %1287
        %v1289 = vmul.f32 %v1288, %v1155
        %v1290 = vsub.f32 %v1283, %v1289
        %v1291 = vmul.f32 %v1290, %v1290
        %v1292 = vsel %vm887, %v1291, 0.0
        %1293 = vadd.xlane.f32.xlu0 %v1292
        %v1294 = vpop.xlane.xlu0 %1293
        %v1295 = vmul.f32 %v1294, %v1155
        %v1296 = vadd.f32 %v1295, 1e-12
        %v1297 = vrsqrt.pop %v1296
        %v1298 = vmul.f32 %v1297, %v1296
        %v1299 = vmul.f32 %v1298, %v1297
        %v1300 = vmul.f32 0.5, %v1299
        %v1301 = vsub.f32 1.5, %v1300
        %v1302 = vmul.f32 %v1297, %v1301
        %vm1303 = vweird.f32 %v1296
        %vm1304 = vweird.f32 %v1297
        %vm1305 = vmor %vm1303, %vm1304
        %v1306 = vsel %vm1305, %v1297, %v1302
        %v1307 = vmul.f32 %v1290, %v1306
        %v1309 = vperm.slane %v1284, 0
        %v1311 = vmul.f32 %v1307, %v1309
        %v1313 = vperm.slane %v1285, 0
        %v1315 = vadd.f32 %v1311, %v1313
        %1316 = vst.msk [vmem:[#allocation2] sm:$0xff] %vm887, %v1315
        %p1317 = scmp.eq.s32.totalorder %s37, 1
        // Predicated region
        $region97: #{sbert_forward.1} parent=91 // pred_check
          %p1318 = pneg %p1317
        $region98: #{sbert_forward.1} parent=91 // pred_check_branch
          %1320 = sbr.rel (%p1318) target = $region100
        $region99: #{sbert_forward.1} parent=91 // pred_region
          %vm1321 = vcmp.ge.f32.partialorder %v865, -0.5
          %v1322 = vsel %vm1321, 1, 0
          %v1323 = vcvt.s32.f32 %v1322
          %v1325 = vsel %vm998, %v1323, 0
          %1327 = vmatpush.msra.mxu0 0.0
          %1328 = vmatpush.msra.mxu0 0.0
          %1329 = vmatpush.msra.mxu0 0.0
          %1330 = vmatpush.msra.mxu0 0.0
          %1331 = vmatpush.msra.mxu0 0.0
          %1332 = vmatpush.msra.mxu0 0.0
          %1333 = vmatpush.msra.mxu0 0.0
          %1334 = vmatpush.msra.mxu0 0.0
          %1335 = vmatpush.msra.mxu0 0.0
          %1336 = vmatpush.msra.mxu0 0.0
          %1337 = vmatpush.msra.mxu0 0.0
          %1338 = vmatpush.msra.mxu0 0.0
          %1339 = vmatpush.msra.mxu0 0.0
          %1340 = vmatpush.msra.mxu0 0.0
          %1341 = vmatpush.msra.mxu0 0.0
          %1342 = vmatpush.msra.mxu0 %v1315
          %1343 = vmatmul.f32.gmra.mxu0 %v1325
          %v1344 = vpop.f32.mrf.mxu0
          %v1345 = vadd.f32 0.0, %v1344
          %1346 = vdwg.mxu0
          %vm1347 = vcmask 57344
          %v1348 = vsel %vm1347, %v1323, 0.0
          %1349 = vadd.xlane.f32.xlu0 %v1348
          %v1350 = vpop.xlane.xlu0 %1349
          %v1351 = vmax.f32 %v1350, 1e-09
          %v1352 = vrcp.pop %v1351
          %v1353 = vmul.f32 %v1351, %v1352
          %v1354 = vsub.f32 1.0, %v1353
          %v1355 = vmul.f32 %v1352, %v1354
          %v1356 = vadd.f32 %v1352, %v1355
          %vm1357 = vweird.f32 %v1351
          %vm1358 = vweird.f32 %v1352
          %vm1359 = vmor %vm1357, %vm1358
          %v1360 = vsel %vm1359, %v1352, %v1356
          %v1361 = vand.u32 2147483647, %v1351
          %vm1362 = vcmp.eq.f32.partialorder %v1361, 8.507059e+37
          %v1363 = vand.u32 %v1351, 2147483648
          %v1364 = vor.u32 1.1754944e-38, %v1363
          %v1365 = vsel %vm1362, %v1364, %v1360
          %v1366 = vmul.f32 %v1345, %v1365
          %vm1367 = vcmask 253952
          %1368 = vst.msk [vmem:[%s788] sm:$0x1] %vm1367, %v1366
        $region100: #{sbert_forward.1} parent=91 // pred_fallthru
          _
        %s1369 = sand.u32 %s520, 1
        %s1370 = scalar_lea.sflag [#allocation5], %s1369
        %s1371 = sand.u32 %s520, 1
        %s1372 = scalar_lea.vmem [#allocation4], %s1371
        // Predicated region
        $region101: #{sbert_forward.1} parent=91 // pred_check
          %p1373 = pneg %p530
        $region102: #{sbert_forward.1} parent=91 // pred_check_branch
          %1375 = sbr.rel (%p1373) target = $region104
        $region103: #{sbert_forward.1} parent=91 // pred_region
          %1377 = vsyncadd %s1370, 0
          %s1378 = scalar_lea.hbm %s18, %s36
          %s1380 = sshll.u32 %s1372, 4
          %s1381 = int_to_ptr.vmem [resolvable:$true] %s1380
          %s1382 = sshll.u32 %s1378, 4
          %s1383 = int_to_ptr.hbm [resolvable:$true] %s1382
          %1385 = dma.vmem_to_hbm [thread:$0]  %s1381, 16, %s1383, %s1370
        $region104: #{sbert_forward.1} parent=91 // pred_fallthru
          _
      $region92: #{sbert_forward.1} parent=5 // pred_fallthru
        _
      %p1386 = scmp.le.s32.totalorder 2, %s27
      // Predicated region
      $region105: #{sbert_forward.1} parent=5 // pred_check
        %p1387 = pneg %p1386
      $region106: #{sbert_forward.1} parent=5 // pred_check_branch
        %1389 = sbr.rel (%p1387) target = $region108
      $region107: #{sbert_forward.1} parent=5 // pred_region
        %s1390 = ssub.s32 %s27, 2
        // Predicated region
        $region109: #{sbert_forward.1} parent=107 // pred_check
          %p1391 = pneg %p536
        $region110: #{sbert_forward.1} parent=107 // pred_check_branch
          %1393 = sbr.rel (%p1391) target = $region112
        $region111: #{sbert_forward.1} parent=107 // pred_region
          %s1394 = sand.u32 %s521, 1
          %s1395 = scalar_lea.sflag [#allocation5], %s1394
          %s1396 = sand.u32 %s521, 1
          %s1397 = scalar_lea.vmem [#allocation4], %s1396
          %1399 = dma.done %s1395, 16
        $region112: #{sbert_forward.1} parent=107 // pred_fallthru
          _
      $region108: #{sbert_forward.1} parent=5 // pred_fallthru
        _
    $region6: #{sbert_forward.1} parent=1 // loop_footer
      %s31 = sadd.s32 1, %s27
    $region7: #{sbert_forward.1} parent=1 // loop_footer_branch
      %26 = sbr.rel target = $region3
    $region8: #{sbert_forward.1} parent=1 // loop_exit
      _
    %1400 = vsyncpa [#allocation5], 1
    %s1401 = scalar_lea.sflag [#allocation5], 1
    %1402 = vsyncpa %s1401, 1

</llo_original>
